<compile_context>
chip_gen: v7x
topology: tpu7x:2x2x1
jax: 0.10.0
libtpu: 0.0.40
codegen_flags: <defaults>
</compile_context>

<pallas_src>
import functools

import jax
import jax.numpy as jnp
from jax import lax
from jax.experimental import pallas as pl
from jax.experimental.pallas import tpu as pltpu


# ----------------------------------------------------------------------------
# Small helpers
# ----------------------------------------------------------------------------
def _round_up(x, m):
    return ((x + m - 1) // m) * m


def _pad2d(a, rows, cols):
    return jnp.pad(a, ((0, rows - a.shape[0]), (0, cols - a.shape[1])))


def _vmem_capacity_bytes():
    try:
        cap = int(pltpu.get_tpu_info().vmem_capacity_bytes)
        if cap > 0:
            return cap
    except Exception:
        pass
    return 64 * 1024 * 1024  # conservative default (v7x per-TC VMEM)


_VMEM_CAP = _vmem_capacity_bytes()
# ~75% of physical: 96 MiB on v5e/v6e (128 MiB), 48 MiB on v7x (64 MiB).
_VMEM_LIMIT_BYTES = max(32 * 1024 * 1024,
                        min(_VMEM_CAP * 3 // 4, _VMEM_CAP - (8 << 20)))
# deeper A-stream pipelining where VMEM allows it (v5e/v6e); 2 (default) on v7x.
_A_BUFFERS = 3 if _VMEM_CAP >= (100 << 20) else 2


def _spec(block_shape, index_map, *, buffers=None, use_pipeline_modes=True):
    """BlockSpec with an optional buffer-count override (falls back gracefully)."""
    if buffers is not None and use_pipeline_modes and hasattr(pl, "Buffered"):
        try:
            return pl.BlockSpec(block_shape, index_map,
                                pipeline_mode=pl.Buffered(buffers))
        except TypeError:
            pass
    return pl.BlockSpec(block_shape, index_map)


def _choose_tiles(n, red_w, out_w, resident_bytes, vmem_limit_bytes, buf_a):
    """Pick (tm, tk) so the per-step VMEM footprint fits the generation's budget."""
    n128 = _round_up(max(n, 1), 128)
    budget = int(vmem_limit_bytes * 0.6)  # headroom for compiler-internal scratch
    best = (128, 128)
    for tm in (512, 256, 128):
        if tm > max(n128, 128):
            continue
        for tk in (2048, 1024, 512, 256, 128):
            if tk > max(n128, 256):
                continue
            need = (
                buf_a * tm * tk * 2          # streamed A blocks (bf16)
                + 2 * tk * red_w * 2         # streamed Z / X k-block (bf16, dbl buffered)
                + resident_bytes             # single-buffered resident weights/biases
                + tm * red_w * 4             # f32 accumulator scratch
                + 2 * tm * out_w * 4         # output block
                + (2 << 20)                  # semaphores / slack
            )
            if need <= budget and tm * tk > best[0] * best[1]:
                best = (tm, tk)
    tm, tk = best
    # keep >= 4 row tiles when the graph allows it so both v7x TensorCores get
    # several pipelined grid steps each.
    while tm > 128 and _round_up(n128, max(tm, tk)) // tm < 4:
        tm //= 2
    return tm, tk


def _use_folded_layer1(f, h):
    return _round_up(f, 128) <= _round_up(h, 128)


# ----------------------------------------------------------------------------
# Pallas kernels
# ----------------------------------------------------------------------------
def linear_kernel(x_ref, w_ref, o_ref):
    # o = x @ w   (bf16 MXU inputs, f32 accumulation, bf16 out)
    o_ref[...] = jnp.dot(
        x_ref[...], w_ref[...], preferred_element_type=jnp.float32
    ).astype(o_ref.dtype)


def agg_relu_linear_kernel(amap_ref, a_ref, z_ref, b1_ref, w2_ref, o_ref, acc_ref):
    # acc = sum_k A[i,k] @ Z1[k] ; epilogue: o = relu(acc + b1) @ W2
    i = pl.program_id(0)
    k = pl.program_id(1)
    n_k = pl.num_programs(1)

    @pl.when(k == 0)
    def _():
        acc_ref[...] = jnp.zeros_like(acc_ref)

    @pl.when(amap_ref[i * n_k + k] == k)  # skip accumulate for all-zero A blocks
    def _():
        acc_ref[...] += jnp.dot(a_ref[...], z_ref[...],
                                preferred_element_type=jnp.float32)

    @pl.when(k == n_k - 1)
    def _():
        h = jnp.maximum(acc_ref[...] + b1_ref[...], 0.0).astype(jnp.bfloat16)
        o_ref[...] = jnp.dot(h, w2_ref[...],
                             preferred_element_type=jnp.float32).astype(o_ref.dtype)


def agg_fold_relu_linear_kernel(amap_ref, a_ref, x_ref, w1_ref, b1_ref, w2_ref,
                                o_ref, acc_ref):
    # acc = sum_k A[i,k] @ X[k] ; epilogue: o = relu(acc @ W1 + b1) @ W2
    i = pl.program_id(0)
    k = pl.program_id(1)
    n_k = pl.num_programs(1)

    @pl.when(k == 0)
    def _():
        acc_ref[...] = jnp.zeros_like(acc_ref)

    @pl.when(amap_ref[i * n_k + k] == k)
    def _():
        acc_ref[...] += jnp.dot(a_ref[...], x_ref[...],
                                preferred_element_type=jnp.float32)

    @pl.when(k == n_k - 1)
    def _():
        agg = acc_ref[...].astype(jnp.bfloat16)
        h = jnp.maximum(
            jnp.dot(agg, w1_ref[...], preferred_element_type=jnp.float32)
            + b1_ref[...], 0.0).astype(jnp.bfloat16)
        o_ref[...] = jnp.dot(h, w2_ref[...],
                             preferred_element_type=jnp.float32).astype(o_ref.dtype)


def agg_logsoftmax_kernel(amap_ref, a_ref, z_ref, b2_ref, o_ref, acc_ref, *,
                          num_classes):
    # acc = sum_k A[i,k] @ Z2[k] ; epilogue: mask padded class lanes, log_softmax
    i = pl.program_id(0)
    k = pl.program_id(1)
    n_k = pl.num_programs(1)

    @pl.when(k == 0)
    def _():
        acc_ref[...] = jnp.zeros_like(acc_ref)

    @pl.when(amap_ref[i * n_k + k] == k)
    def _():
        acc_ref[...] += jnp.dot(a_ref[...], z_ref[...],
                                preferred_element_type=jnp.float32)

    @pl.when(k == n_k - 1)
    def _():
        logits = acc_ref[...] + b2_ref[...]
        col = lax.broadcasted_iota(jnp.int32, logits.shape, 1)
        logits = jnp.where(col < num_classes, logits, jnp.float32(-1e30))
        m = jnp.max(logits, axis=-1, keepdims=True)
        z = logits - m
        lse = jnp.log(jnp.sum(jnp.exp(z), axis=-1, keepdims=True))
        o_ref[...] = (z - lse).astype(o_ref.dtype)


# ----------------------------------------------------------------------------
# Adjacency construction (built directly at padded shape, cast once) + block map
# ----------------------------------------------------------------------------
def build_normalized_adjacency_padded(edge_index, edge_weight, num_nodes, n_pad,
                                      out_dtype=jnp.bfloat16):
    """Dense GCN normalization D^-1/2 (A + I) D^-1/2 at padded shape.

    edge_index is treated as a directed edge list (PyG gcn_norm style); padded
    rows/cols stay exactly zero so they contribute nothing downstream.
    """
    if edge_weight is None:
        edge_weight = jnp.ones((edge_index.shape[1],), jnp.float32)
    src, dst = edge_index[0], edge_index[1]
    adj = jnp.zeros((n_pad, n_pad), jnp.float32)
    adj = adj.at[dst, src].add(edge_weight.astype(jnp.float32))
    idx = jnp.arange(n_pad)
    adj = adj.at[idx, idx].add((idx < num_nodes).astype(jnp.float32))  # self loops
    deg = jnp.sum(adj, axis=1)
    d_inv_sqrt = jnp.where(deg > 0, lax.rsqrt(deg), 0.0)
    a = adj * d_inv_sqrt[:, None] * d_inv_sqrt[None, :]
    return a.astype(out_dtype)


def _block_skip_map(a_pad, tm, tk):
    """Flattened (rows*k,) int32 map for the block-sparse skip.

    map[i*n_k + k] == k  -> block (i,k) has nonzeros: fetch it and accumulate.
    map[i*n_k + k] == k' -> block is all-zero: repeat the previously fetched block
                            index (DMA elided by the pipeline); kernel skips the
                            accumulate because map != k.
    """
    n_i = a_pad.shape[0] // tm
    n_k = a_pad.shape[1] // tk
    blocks = a_pad.reshape(n_i, tm, n_k, tk)
    nnz = jnp.any(blocks != 0, axis=(1, 3))                       # (n_i, n_k)
    k_idx = jnp.arange(n_k, dtype=jnp.int32)[None, :]
    marked = jnp.where(nnz, k_idx, jnp.int32(-1))
    prev_nz = lax.cummax(marked, axis=1)
    amap = jnp.where(prev_nz >= 0, prev_nz, 0).astype(jnp.int32)
    return amap.reshape(-1)


# ----------------------------------------------------------------------------
# Forward pass wrapper
# ----------------------------------------------------------------------------
def gcn_forward_pallas(features, edge_index, edge_weight, w1, b1, w2, b2, *,
                       use_pipeline_modes=True):
    n, f = features.shape
    h = w1.shape[1]
    c = w2.shape[1]

    f_pad = _round_up(f, 128)
    h_pad = _round_up(h, 128)
    c_pad = _round_up(c, 128)

    folded = _use_folded_layer1(f, h)   # fold layer-1 transform into the aggregation
    red_w = f_pad if folded else h_pad  # accumulator width

    resident_bytes = ((f_pad * h_pad * 2) if folded else 0) \
        + h_pad * c_pad * 2 + (h_pad + c_pad) * 4
    tm, tk = _choose_tiles(n, red_w, max(h_pad, c_pad), resident_bytes,
                           _VMEM_LIMIT_BYTES, _A_BUFFERS)
    n_pad = _round_up(n, max(tm, tk))
    n_i, n_k = n_pad // tm, n_pad // tk

    # adjacency built at padded shape, bf16 once (no extra pad/cast pass)
    a_p = build_normalized_adjacency_padded(edge_index, edge_weight, n, n_pad)
    amap = _block_skip_map(a_p, tm, tk)

    x_p = _pad2d(features, n_pad, f_pad).astype(jnp.bfloat16)
    w1_p = _pad2d(w1, f_pad, h_pad).astype(jnp.bfloat16)
    w2_p = _pad2d(w2, h_pad, c_pad).astype(jnp.bfloat16)
    b1_p = jnp.pad(b1, (0, h_pad - h)).reshape(1, h_pad).astype(jnp.float32)
    b2_p = jnp.pad(b2, (0, c_pad - c)).reshape(1, c_pad).astype(jnp.float32)

    cparams = pltpu.CompilerParams(
        dimension_semantics=("parallel", "arbitrary"),
        vmem_limit_bytes=_VMEM_LIMIT_BYTES,
    )
    a_buffers = _A_BUFFERS if _A_BUFFERS != 2 else None   # 2 is already the default

    def spec(bs, imap, buffers=None):
        return _spec(bs, imap, buffers=buffers,
                     use_pipeline_modes=use_pipeline_modes)

    # index maps (the scalar-prefetched block map is passed positionally)
    a_map = lambda i, k, m: (i, m[i * n_k + k])
    zk_map = lambda i, k, m: (m[i * n_k + k], 0)
    res_map = lambda i, k, m: (0, 0)
    out_map = lambda i, k, m: (i, 0)

    # ----- Stage 2: Z2 = relu(layer1(A, X) + b1) @ W2 ------------------------
    if folded:
        z2 = pl.pallas_call(
            agg_fold_relu_linear_kernel,
            out_shape=jax.ShapeDtypeStruct((n_pad, c_pad), jnp.bfloat16),
            grid_spec=pltpu.PrefetchScalarGridSpec(
                num_scalar_prefetch=1,
                grid=(n_i, n_k),
                in_specs=[
                    spec((tm, tk), a_map, buffers=a_buffers),
                    spec((tk, f_pad), zk_map),
                    spec((f_pad, h_pad), res_map, buffers=1),
                    spec((1, h_pad), res_map, buffers=1),
                    spec((h_pad, c_pad), res_map, buffers=1),
                ],
                out_specs=spec((tm, c_pad), out_map),
                scratch_shapes=[pltpu.VMEM((tm, f_pad), jnp.float32)],
            ),
            compiler_params=cparams,
        )(amap, a_p, x_p, w1_p, b1_p, w2_p)
    else:
        # Stage 1: Z1 = X @ W1  (row-tiled; W1 resident)
        # TODO(synk): K-tile stage 1 over F for very large feature widths.
        z1 = pl.pallas_call(
            linear_kernel,
            out_shape=jax.ShapeDtypeStruct((n_pad, h_pad), jnp.bfloat16),
            grid=(n_pad // tm,),
            in_specs=[
                spec((tm, f_pad), lambda i: (i, 0)),
                spec((f_pad, h_pad), lambda i: (0, 0), buffers=1),
            ],
            out_specs=spec((tm, h_pad), lambda i: (i, 0)),
            compiler_params=pltpu.CompilerParams(
                dimension_semantics=("parallel",),
                vmem_limit_bytes=_VMEM_LIMIT_BYTES,
            ),
        )(x_p, w1_p)

        z2 = pl.pallas_call(
            agg_relu_linear_kernel,
            out_shape=jax.ShapeDtypeStruct((n_pad, c_pad), jnp.bfloat16),
            grid_spec=pltpu.PrefetchScalarGridSpec(
                num_scalar_prefetch=1,
                grid=(n_i, n_k),
                in_specs=[
                    spec((tm, tk), a_map, buffers=a_buffers),
                    spec((tk, h_pad), zk_map),
                    spec((1, h_pad), res_map, buffers=1),
                    spec((h_pad, c_pad), res_map, buffers=1),
                ],
                out_specs=spec((tm, c_pad), out_map),
                scratch_shapes=[pltpu.VMEM((tm, h_pad), jnp.float32)],
            ),
            compiler_params=cparams,
        )(amap, a_p, z1, b1_p, w2_p)

    # ----- Stage 3: out = log_softmax(A @ Z2 + b2) ----------------------------
    out_pad = pl.pallas_call(
        functools.partial(agg_logsoftmax_kernel, num_classes=c),
        out_shape=jax.ShapeDtypeStruct((n_pad, c_pad), jnp.float32),
        grid_spec=pltpu.PrefetchScalarGridSpec(
            num_scalar_prefetch=1,
            grid=(n_i, n_k),
            in_specs=[
                spec((tm, tk), a_map, buffers=a_buffers),
                spec((tk, c_pad), zk_map),
                spec((1, c_pad), res_map, buffers=1),
            ],
            out_specs=spec((tm, c_pad), out_map),
            scratch_shapes=[pltpu.VMEM((tm, c_pad), jnp.float32)],
        ),
        compiler_params=cparams,
    )(amap, a_p, z2, b2_p)

    return out_pad[:n, :c]


# ----------------------------------------------------------------------------
# Plain-JAX glue (edge-noise sampling, reference) and RS wrapper
# ----------------------------------------------------------------------------
def sample_noise_all(key, prob_drop, edge_index, edge_weight):
    """Pure-JAX analogue of RS.sample_noise_all (Bernoulli edge retention).

    Retained edges get weight 1 (as in the reference); dropped edges get weight 0
    instead of being compacted so all shapes stay static on TPU.
    """
    prob_retain = 1.0 - prob_drop
    E = edge_index.shape[1]
    del edge_weight  # reference sets retained weights to ones regardless
    mask = jax.random.bernoulli(key, prob_retain, (E,)).astype(jnp.float32)
    return edge_index, mask


def gcn_forward_reference(a_norm, x, w1, b1, w2, b2, folded):
    """Pure-JAX reference mirroring the kernel's bf16 rounding points."""
    bf = jnp.bfloat16
    a = a_norm.astype(bf)
    if folded:
        agg = jnp.dot(a, x.astype(bf), preferred_element_type=jnp.float32).astype(bf)
        h = jnp.maximum(
            jnp.dot(agg, w1.astype(bf), preferred_element_type=jnp.float32) + b1, 0.0
        ).astype(bf)
    else:
        z1 = jnp.dot(x.astype(bf), w1.astype(bf),
                     preferred_element_type=jnp.float32).astype(bf)
        h = jnp.maximum(
            jnp.dot(a, z1, preferred_element_type=jnp.float32) + b1, 0.0
        ).astype(bf)
    z2 = jnp.dot(h, w2.astype(bf), preferred_element_type=jnp.float32).astype(bf)
    logits = jnp.dot(a, z2, preferred_element_type=jnp.float32) + b2
    return jax.nn.log_softmax(logits, axis=-1)


class RSPallas:
    """RS wrapper around a synthetic 2-layer GCN whose forward runs in Pallas kernels."""

    def __init__(self, model_name, prob_drop, num_features, num_hidden, num_classes, key):
        assert 0 < prob_drop < 1, "prob_drop must be between 0 and 1 (exclusive)"
        self.model_name = model_name
        self.prob_drop = prob_drop
        k1, k2, k3, k4 = jax.random.split(key, 4)
        s1 = 1.0 / jnp.sqrt(jnp.float32(num_features))
        s2 = 1.0 / jnp.sqrt(jnp.float32(num_hidden))
        self.w1 = jax.random.normal(k1, (num_features, num_hidden), jnp.float32) * s1
        self.b1 = jax.random.normal(k2, (num_hidden,), jnp.float32) * 0.01
        self.w2 = jax.random.normal(k3, (num_hidden, num_classes), jnp.float32) * s2
        self.b2 = jax.random.normal(k4, (num_classes,), jnp.float32) * 0.01

    def forward(self, features, edge_index, edge_weight):
        if self.model_name != "GCN":
            raise NotImplementedError("No implemented model")
        try:
            return gcn_forward_pallas(features, edge_index, edge_weight,
                                      self.w1, self.b1, self.w2, self.b2,
                                      use_pipeline_modes=True)
        except Exception:
            # Fallback if this JAX build rejects BlockSpec pipeline_mode / pl.Buffered.
            return gcn_forward_pallas(features, edge_index, edge_weight,
                                      self.w1, self.b1, self.w2, self.b2,
                                      use_pipeline_modes=False)


if __name__ == "__main__":
    key = jax.random.PRNGKey(0)
    k_feat, k_edge, k_model, k_noise = jax.random.split(key, 4)

    # Small graph but multi-tile grid (N=300 -> tm=128, tk=256, n_pad=512, grid=(4, 2))
    N, F, H, C, E = 300, 32, 32, 8, 900

    features = jax.random.normal(k_feat, (N, F), jnp.float32)
    edge_index = jax.random.randint(k_edge, (2, E), 0, N, dtype=jnp.int32)
    edge_weight = jnp.ones((E,), dtype=jnp.float32)

    rs = RSPallas("GCN", prob_drop=0.3, num_features=F, num_hidden=H,
                  num_classes=C, key=k_model)

    # randomized-smoothing edge dropping, as RS.fit/test would do
    rs_edge_index, rs_edge_weight = sample_noise_all(k_noise, rs.prob_drop,
                                                     edge_index, edge_weight)

    out = rs.forward(features, rs_edge_index, rs_edge_weight)
    out = jax.block_until_ready(out)

    assert out.shape == (N, C)
    # rows of log_softmax must sum to 1 in probability space
    row_sums = jnp.sum(jnp.exp(out), axis=-1)
    assert bool(jnp.all(jnp.abs(row_sums - 1.0) < 1e-4)), "log_softmax rows must normalize"

    # cross-check against a pure-JAX reference with matching bf16 rounding points
    a_bf = build_normalized_adjacency_padded(rs_edge_index, rs_edge_weight, N, N)
    ref = gcn_forward_reference(a_bf, features, rs.w1, rs.b1, rs.w2, rs.b2,
                                folded=_use_folded_layer1(F, H))
    max_err = float(jnp.max(jnp.abs(out - ref)))
    assert max_err < 2e-2, f"mismatch vs reference: {max_err}"

    print("KERNEL_OK")
</pallas_src>

<mosaic_0001>
module attributes {stable_mosaic.version = 11 : i64} {
  func.func @agg_fold_relu_linear_kernel(%arg0: i32, %arg1: i32, %arg2: memref<8xi32, #tpu.memory_space<smem>>, %arg3: memref<128x256xbf16, #tpu.memory_space<vmem>>, %arg4: memref<256x128xbf16, #tpu.memory_space<vmem>>, %arg5: memref<128x128xbf16, #tpu.memory_space<vmem>>, %arg6: memref<1x128xf32, #tpu.memory_space<vmem>>, %arg7: memref<128x128xbf16, #tpu.memory_space<vmem>>, %arg8: memref<128x128xbf16, #tpu.memory_space<vmem>>, %arg9: memref<128x128xf32, #tpu.memory_space<vmem>>) attributes {dimension_semantics = [#tpu.dimension_semantics<parallel>, #tpu.dimension_semantics<arbitrary>], iteration_bounds = array<i64: 4, 2>, scalar_prefetch = 1 : i64, scratch_operands = 1 : i64, tpu.core_type = #tpu.core_type<tc>, window_params = [{transform_indices = @transform_0, window_bounds = array<i64: 128, 256>}, {transform_indices = @transform_1, window_bounds = array<i64: 256, 128>}, {pipeline_mode = #tpu.pipeline_mode<synchronous>, transform_indices = @transform_2, window_bounds = array<i64: 128, 128>}, {pipeline_mode = #tpu.pipeline_mode<synchronous>, transform_indices = @transform_3, window_bounds = array<i64: 1, 128>}, {pipeline_mode = #tpu.pipeline_mode<synchronous>, transform_indices = @transform_4, window_bounds = array<i64: 128, 128>}, {transform_indices = @transform_5, window_bounds = array<i64: 128, 128>}]} {
    %c0_i32 = arith.constant 0 : i32
    %0 = arith.cmpi eq, %arg1, %c0_i32 : i32
    %1 = arith.extui %0 : i1 to i32
    %c0_i32_0 = arith.constant 0 : i32
    %2 = arith.cmpi ne, %1, %c0_i32_0 : i32
    scf.if %2 {
      %cst = arith.constant 0.000000e+00 : f32
      %13 = vector.broadcast %cst : f32 to vector<128x128xf32>
      %c0 = arith.constant 0 : index
      %c0_3 = arith.constant 0 : index
      %14 = vector.load %arg9[%c0, %c0_3] : memref<128x128xf32, #tpu.memory_space<vmem>>, vector<128x128xf32>
      tpu.vector_store %arg9[%c0, %c0_3], %13 {strides = array<i32>} : memref<128x128xf32, #tpu.memory_space<vmem>>, vector<128x128xf32>,
    } else {
    }
    %c2_i32 = arith.constant 2 : i32
    %3 = arith.muli %arg0, %c2_i32 : i32
    %4 = arith.addi %3, %arg1 : i32
    %5 = arith.index_cast %4 : i32 to index
    %6 = memref.load %arg2[%5] : memref<8xi32, #tpu.memory_space<smem>>
    %7 = arith.cmpi eq, %6, %arg1 : i32
    %8 = arith.extui %7 : i1 to i32
    %c0_i32_1 = arith.constant 0 : i32
    %9 = arith.cmpi ne, %8, %c0_i32_1 : i32
    scf.if %9 {
      %c0 = arith.constant 0 : index
      %c0_3 = arith.constant 0 : index
      %13 = vector.load %arg9[%c0, %c0_3] : memref<128x128xf32, #tpu.memory_space<vmem>>, vector<128x128xf32>
      %c0_4 = arith.constant 0 : index
      %c0_5 = arith.constant 0 : index
      %14 = vector.load %arg3[%c0_4, %c0_5] : memref<128x256xbf16, #tpu.memory_space<vmem>>, vector<128x256xbf16>
      %c0_6 = arith.constant 0 : index
      %c0_7 = arith.constant 0 : index
      %15 = vector.load %arg4[%c0_6, %c0_7] : memref<256x128xbf16, #tpu.memory_space<vmem>>, vector<256x128xbf16>
      %cst = arith.constant dense<0.000000e+00> : vector<128x128xf32>
      %16 = tpu.matmul %14, %15, %cst {dimension_numbers = #tpu.dot_dimension_numbers<[1], [0], [0], [1], [0, 0, 1, 1], [], []>} : vector<128x256xbf16>, vector<256x128xbf16>, vector<128x128xf32> -> vector<128x128xf32>
      %17 = arith.addf %13, %16 : vector<128x128xf32>
      %c0_8 = arith.constant 0 : index
      %c0_9 = arith.constant 0 : index
      %18 = vector.load %arg9[%c0_8, %c0_9] : memref<128x128xf32, #tpu.memory_space<vmem>>, vector<128x128xf32>
      tpu.vector_store %arg9[%c0_8, %c0_9], %17 {strides = array<i32>} : memref<128x128xf32, #tpu.memory_space<vmem>>, vector<128x128xf32>,
    } else {
    }
    %c1_i32 = arith.constant 1 : i32
    %10 = arith.cmpi eq, %arg1, %c1_i32 : i32
    %11 = arith.extui %10 : i1 to i32
    %c0_i32_2 = arith.constant 0 : i32
    %12 = arith.cmpi ne, %11, %c0_i32_2 : i32
    scf.if %12 {
      %c0 = arith.constant 0 : index
      %c0_3 = arith.constant 0 : index
      %13 = vector.load %arg9[%c0, %c0_3] : memref<128x128xf32, #tpu.memory_space<vmem>>, vector<128x128xf32>
      %14 = arith.truncf %13 : vector<128x128xf32> to vector<128x128xbf16>
      %c0_4 = arith.constant 0 : index
      %c0_5 = arith.constant 0 : index
      %15 = vector.load %arg5[%c0_4, %c0_5] : memref<128x128xbf16, #tpu.memory_space<vmem>>, vector<128x128xbf16>
      %cst = arith.constant dense<0.000000e+00> : vector<128x128xf32>
      %16 = tpu.matmul %14, %15, %cst {dimension_numbers = #tpu.dot_dimension_numbers<[1], [0], [0], [1], [0, 0, 1, 1], [], []>} : vector<128x128xbf16>, vector<128x128xbf16>, vector<128x128xf32> -> vector<128x128xf32>
      %c0_6 = arith.constant 0 : index
      %c0_7 = arith.constant 0 : index
      %17 = vector.load %arg6[%c0_6, %c0_7] : memref<1x128xf32, #tpu.memory_space<vmem>>, vector<1x128xf32>
      %18 = vector.broadcast %17 : vector<1x128xf32> to vector<128x128xf32>
      %19 = arith.addf %16, %18 : vector<128x128xf32>
      %cst_8 = arith.constant 0.000000e+00 : f32
      %20 = vector.broadcast %cst_8 : f32 to vector<128x128xf32>
      %21 = arith.maximumf %19, %20 : vector<128x128xf32>
      %22 = arith.truncf %21 : vector<128x128xf32> to vector<128x128xbf16>
      %c0_9 = arith.constant 0 : index
      %c0_10 = arith.constant 0 : index
      %23 = vector.load %arg7[%c0_9, %c0_10] : memref<128x128xbf16, #tpu.memory_space<vmem>>, vector<128x128xbf16>
      %cst_11 = arith.constant dense<0.000000e+00> : vector<128x128xf32>
      %24 = tpu.matmul %22, %23, %cst_11 {dimension_numbers = #tpu.dot_dimension_numbers<[1], [0], [0], [1], [0, 0, 1, 1], [], []>} : vector<128x128xbf16>, vector<128x128xbf16>, vector<128x128xf32> -> vector<128x128xf32>
      %25 = arith.truncf %24 : vector<128x128xf32> to vector<128x128xbf16>
      %c0_12 = arith.constant 0 : index
      %c0_13 = arith.constant 0 : index
      %26 = vector.load %arg8[%c0_12, %c0_13] : memref<128x128xbf16, #tpu.memory_space<vmem>>, vector<128x128xbf16>
      tpu.vector_store %arg8[%c0_12, %c0_13], %25 {strides = array<i32>} : memref<128x128xbf16, #tpu.memory_space<vmem>>, vector<128x128xbf16>,
    } else {
    }
    return
  }
  func.func @transform_0(%arg0: i32, %arg1: i32, %arg2: memref<8xi32, #tpu.memory_space<smem>>) -> (i32, i32) {
    %c2_i32 = arith.constant 2 : i32
    %0 = arith.muli %arg0, %c2_i32 : i32
    %1 = arith.addi %0, %arg1 : i32
    %2 = arith.index_cast %1 : i32 to index
    %3 = memref.load %arg2[%2] : memref<8xi32, #tpu.memory_space<smem>>
    %c0_i32 = arith.constant 0 : i32
    return %arg0, %3 : i32, i32
  }
  func.func @transform_1(%arg0: i32, %arg1: i32, %arg2: memref<8xi32, #tpu.memory_space<smem>>) -> (i32, i32) {
    %c2_i32 = arith.constant 2 : i32
    %0 = arith.muli %arg0, %c2_i32 : i32
    %1 = arith.addi %0, %arg1 : i32
    %2 = arith.index_cast %1 : i32 to index
    %3 = memref.load %arg2[%2] : memref<8xi32, #tpu.memory_space<smem>>
    %c0_i32 = arith.constant 0 : i32
    %c0_i32_0 = arith.constant 0 : i32
    return %3, %c0_i32 : i32, i32
  }
  func.func @transform_2(%arg0: i32, %arg1: i32, %arg2: memref<8xi32, #tpu.memory_space<smem>>) -> (i32, i32) {
    %c0_i32 = arith.constant 0 : i32
    %c0_i32_0 = arith.constant 0 : i32
    %c0_i32_1 = arith.constant 0 : i32
    return %c0_i32, %c0_i32_0 : i32, i32
  }
  func.func @transform_3(%arg0: i32, %arg1: i32, %arg2: memref<8xi32, #tpu.memory_space<smem>>) -> (i32, i32) {
    %c0_i32 = arith.constant 0 : i32
    %c0_i32_0 = arith.constant 0 : i32
    %c0_i32_1 = arith.constant 0 : i32
    return %c0_i32, %c0_i32_0 : i32, i32
  }
  func.func @transform_4(%arg0: i32, %arg1: i32, %arg2: memref<8xi32, #tpu.memory_space<smem>>) -> (i32, i32) {
    %c0_i32 = arith.constant 0 : i32
    %c0_i32_0 = arith.constant 0 : i32
    %c0_i32_1 = arith.constant 0 : i32
    return %c0_i32, %c0_i32_0 : i32, i32
  }
  func.func @transform_5(%arg0: i32, %arg1: i32, %arg2: memref<8xi32, #tpu.memory_space<smem>>) -> (i32, i32) {
    %c0_i32 = arith.constant 0 : i32
    %c0_i32_0 = arith.constant 0 : i32
    return %arg0, %c0_i32 : i32, i32
  }
}

module attributes {stable_mosaic.version = 11 : i64} {
  func.func @agg_fold_relu_linear_kernel(%arg0: i32, %arg1: i32, %arg2: memref<8xi32, #tpu.memory_space<smem>>, %arg3: memref<128x256xbf16, #tpu.memory_space<vmem>>, %arg4: memref<256x128xbf16, #tpu.memory_space<vmem>>, %arg5: memref<128x128xbf16, #tpu.memory_space<vmem>>, %arg6: memref<1x128xf32, #tpu.memory_space<vmem>>, %arg7: memref<128x128xbf16, #tpu.memory_space<vmem>>, %arg8: memref<128x128xbf16, #tpu.memory_space<vmem>>, %arg9: memref<128x128xf32, #tpu.memory_space<vmem>>) attributes {dimension_semantics = [#tpu.dimension_semantics<parallel>, #tpu.dimension_semantics<arbitrary>], iteration_bounds = array<i64: 4, 2>, scalar_prefetch = 1 : i64, scratch_operands = 1 : i64, tpu.core_type = #tpu.core_type<tc>, window_params = [{transform_indices = @transform_0, window_bounds = array<i64: 128, 256>}, {transform_indices = @transform_1, window_bounds = array<i64: 256, 128>}, {pipeline_mode = #tpu.pipeline_mode<synchronous>, transform_indices = @transform_2, window_bounds = array<i64: 128, 128>}, {pipeline_mode = #tpu.pipeline_mode<synchronous>, transform_indices = @transform_3, window_bounds = array<i64: 1, 128>}, {pipeline_mode = #tpu.pipeline_mode<synchronous>, transform_indices = @transform_4, window_bounds = array<i64: 128, 128>}, {transform_indices = @transform_5, window_bounds = array<i64: 128, 128>}]} {
    %c0_i32 = arith.constant 0 : i32
    %0 = arith.cmpi eq, %arg1, %c0_i32 : i32
    %1 = arith.extui %0 : i1 to i32
    %c0_i32_0 = arith.constant 0 : i32
    %2 = arith.cmpi ne, %1, %c0_i32_0 : i32
    scf.if %2 {
      %cst = arith.constant 0.000000e+00 : f32
      %13 = vector.broadcast %cst : f32 to vector<128x128xf32>
      %c0 = arith.constant 0 : index
      %c0_3 = arith.constant 0 : index
      %14 = vector.load %arg9[%c0, %c0_3] : memref<128x128xf32, #tpu.memory_space<vmem>>, vector<128x128xf32>
      tpu.vector_store %arg9[%c0, %c0_3], %13 {strides = array<i32>} : memref<128x128xf32, #tpu.memory_space<vmem>>, vector<128x128xf32>,
    } else {
    }
    %c2_i32 = arith.constant 2 : i32
    %3 = arith.muli %arg0, %c2_i32 : i32
    %4 = arith.addi %3, %arg1 : i32
    %5 = arith.index_cast %4 : i32 to index
    %6 = memref.load %arg2[%5] : memref<8xi32, #tpu.memory_space<smem>>
    %7 = arith.cmpi eq, %6, %arg1 : i32
    %8 = arith.extui %7 : i1 to i32
    %c0_i32_1 = arith.constant 0 : i32
    %9 = arith.cmpi ne, %8, %c0_i32_1 : i32
    scf.if %9 {
      %c0 = arith.constant 0 : index
      %c0_3 = arith.constant 0 : index
      %13 = vector.load %arg9[%c0, %c0_3] : memref<128x128xf32, #tpu.memory_space<vmem>>, vector<128x128xf32>
      %c0_4 = arith.constant 0 : index
      %c0_5 = arith.constant 0 : index
      %14 = vector.load %arg3[%c0_4, %c0_5] : memref<128x256xbf16, #tpu.memory_space<vmem>>, vector<128x256xbf16>
      %c0_6 = arith.constant 0 : index
      %c0_7 = arith.constant 0 : index
      %15 = vector.load %arg4[%c0_6, %c0_7] : memref<256x128xbf16, #tpu.memory_space<vmem>>, vector<256x128xbf16>
      %cst = arith.constant dense<0.000000e+00> : vector<128x128xf32>
      %16 = tpu.matmul %14, %15, %cst {dimension_numbers = #tpu.dot_dimension_numbers<[1], [0], [0], [1], [0, 0, 1, 1], [], []>} : vector<128x256xbf16>, vector<256x128xbf16>, vector<128x128xf32> -> vector<128x128xf32>
      %17 = arith.addf %13, %16 : vector<128x128xf32>
      %c0_8 = arith.constant 0 : index
      %c0_9 = arith.constant 0 : index
      %18 = vector.load %arg9[%c0_8, %c0_9] : memref<128x128xf32, #tpu.memory_space<vmem>>, vector<128x128xf32>
      tpu.vector_store %arg9[%c0_8, %c0_9], %17 {strides = array<i32>} : memref<128x128xf32, #tpu.memory_space<vmem>>, vector<128x128xf32>,
    } else {
    }
    %c1_i32 = arith.constant 1 : i32
    %10 = arith.cmpi eq, %arg1, %c1_i32 : i32
    %11 = arith.extui %10 : i1 to i32
    %c0_i32_2 = arith.constant 0 : i32
    %12 = arith.cmpi ne, %11, %c0_i32_2 : i32
    scf.if %12 {
      %c0 = arith.constant 0 : index
      %c0_3 = arith.constant 0 : index
      %13 = vector.load %arg9[%c0, %c0_3] : memref<128x128xf32, #tpu.memory_space<vmem>>, vector<128x128xf32>
      %14 = arith.truncf %13 : vector<128x128xf32> to vector<128x128xbf16>
      %c0_4 = arith.constant 0 : index
      %c0_5 = arith.constant 0 : index
      %15 = vector.load %arg5[%c0_4, %c0_5] : memref<128x128xbf16, #tpu.memory_space<vmem>>, vector<128x128xbf16>
      %cst = arith.constant dense<0.000000e+00> : vector<128x128xf32>
      %16 = tpu.matmul %14, %15, %cst {dimension_numbers = #tpu.dot_dimension_numbers<[1], [0], [0], [1], [0, 0, 1, 1], [], []>} : vector<128x128xbf16>, vector<128x128xbf16>, vector<128x128xf32> -> vector<128x128xf32>
      %c0_6 = arith.constant 0 : index
      %c0_7 = arith.constant 0 : index
      %17 = vector.load %arg6[%c0_6, %c0_7] : memref<1x128xf32, #tpu.memory_space<vmem>>, vector<1x128xf32>
      %18 = vector.broadcast %17 : vector<1x128xf32> to vector<128x128xf32>
      %19 = arith.addf %16, %18 : vector<128x128xf32>
      %cst_8 = arith.constant 0.000000e+00 : f32
      %20 = vector.broadcast %cst_8 : f32 to vector<128x128xf32>
      %21 = arith.maximumf %19, %20 : vector<128x128xf32>
      %22 = arith.truncf %21 : vector<128x128xf32> to vector<128x128xbf16>
      %c0_9 = arith.constant 0 : index
      %c0_10 = arith.constant 0 : index
      %23 = vector.load %arg7[%c0_9, %c0_10] : memref<128x128xbf16, #tpu.memory_space<vmem>>, vector<128x128xbf16>
      %cst_11 = arith.constant dense<0.000000e+00> : vector<128x128xf32>
      %24 = tpu.matmul %22, %23, %cst_11 {dimension_numbers = #tpu.dot_dimension_numbers<[1], [0], [0], [1], [0, 0, 1, 1], [], []>} : vector<128x128xbf16>, vector<128x128xbf16>, vector<128x128xf32> -> vector<128x128xf32>
      %25 = arith.truncf %24 : vector<128x128xf32> to vector<128x128xbf16>
      %c0_12 = arith.constant 0 : index
      %c0_13 = arith.constant 0 : index
      %26 = vector.load %arg8[%c0_12, %c0_13] : memref<128x128xbf16, #tpu.memory_space<vmem>>, vector<128x128xbf16>
      tpu.vector_store %arg8[%c0_12, %c0_13], %25 {strides = array<i32>} : memref<128x128xbf16, #tpu.memory_space<vmem>>, vector<128x128xbf16>,
    } else {
    }
    return
  }
  func.func @transform_0(%arg0: i32, %arg1: i32, %arg2: memref<8xi32, #tpu.memory_space<smem>>) -> (i32, i32) {
    %c2_i32 = arith.constant 2 : i32
    %0 = arith.muli %arg0, %c2_i32 : i32
    %1 = arith.addi %0, %arg1 : i32
    %2 = arith.index_cast %1 : i32 to index
    %3 = memref.load %arg2[%2] : memref<8xi32, #tpu.memory_space<smem>>
    %c0_i32 = arith.constant 0 : i32
    return %arg0, %3 : i32, i32
  }
  func.func @transform_1(%arg0: i32, %arg1: i32, %arg2: memref<8xi32, #tpu.memory_space<smem>>) -> (i32, i32) {
    %c2_i32 = arith.constant 2 : i32
    %0 = arith.muli %arg0, %c2_i32 : i32
    %1 = arith.addi %0, %arg1 : i32
    %2 = arith.index_cast %1 : i32 to index
    %3 = memref.load %arg2[%2] : memref<8xi32, #tpu.memory_space<smem>>
    %c0_i32 = arith.constant 0 : i32
    %c0_i32_0 = arith.constant 0 : i32
    return %3, %c0_i32 : i32, i32
  }
  func.func @transform_2(%arg0: i32, %arg1: i32, %arg2: memref<8xi32, #tpu.memory_space<smem>>) -> (i32, i32) {
    %c0_i32 = arith.constant 0 : i32
    %c0_i32_0 = arith.constant 0 : i32
    %c0_i32_1 = arith.constant 0 : i32
    return %c0_i32, %c0_i32_0 : i32, i32
  }
  func.func @transform_3(%arg0: i32, %arg1: i32, %arg2: memref<8xi32, #tpu.memory_space<smem>>) -> (i32, i32) {
    %c0_i32 = arith.constant 0 : i32
    %c0_i32_0 = arith.constant 0 : i32
    %c0_i32_1 = arith.constant 0 : i32
    return %c0_i32, %c0_i32_0 : i32, i32
  }
  func.func @transform_4(%arg0: i32, %arg1: i32, %arg2: memref<8xi32, #tpu.memory_space<smem>>) -> (i32, i32) {
    %c0_i32 = arith.constant 0 : i32
    %c0_i32_0 = arith.constant 0 : i32
    %c0_i32_1 = arith.constant 0 : i32
    return %c0_i32, %c0_i32_0 : i32, i32
  }
  func.func @transform_5(%arg0: i32, %arg1: i32, %arg2: memref<8xi32, #tpu.memory_space<smem>>) -> (i32, i32) {
    %c0_i32 = arith.constant 0 : i32
    %c0_i32_0 = arith.constant 0 : i32
    return %arg0, %c0_i32 : i32, i32
  }
}

</mosaic_0001>

<llo_original>
// kernel: tpu_custom_call.1
$region0: #{tpu_custom_call.1}
  #allocation0 [shape = 'u32[]', space=smem, size = 0x4, offset = 0x4, fixed_abs, tag = 'smem constant byte address 0x4 - core index']
  #allocation1 [shape = 'u32[144,128]{1,0:T(1,128)}', space=vmem, size = 0x12000, scoped, tag = 'internal scratch']
  #allocation2 [shape = 'f32[128,128]{1,0:T(8,128)}', space=vmem, size = 0x10000, scoped, tag = 'scratch operand']
  #allocation3 [shape = 's32[1]{0}', space=sflag, size = 0x4, scoped, tag = 'scoped memory for tpu_custom_call.1']
  #allocation4 [shape = 'u8[512]{0}', space=smem, size = 0x200, scoped, tag = 'prefetched SMEM operand 0']
  %s0 = inlined_call_operand.hbm [shape: s32[8], index: 0, kind: input, shape index: {}]
  %s1 = inlined_call_operand.hbm [shape: bf16[512,512], index: 1, kind: input, shape index: {}]
  %s2 = inlined_call_operand.hbm [shape: bf16[512,128], index: 2, kind: input, shape index: {}]
  %s3 = inlined_call_operand.hbm [shape: bf16[128,128], index: 3, kind: input, shape index: {}]
  %s4 = inlined_call_operand.vmem [shape: f32[1,128], index: 4, kind: input, shape index: {}]
  %s5 = inlined_call_operand.hbm [shape: bf16[128,128], index: 5, kind: input, shape index: {}]
  %s6 = inlined_call_operand.hbm [shape: bf16[512,128], index: 6, kind: output, shape index: {}]
  %s7 = sld [smem:[#allocation0]]
  $region81: #{tpu_custom_call.1} parent=0
    _
  %s9 = ssub.s32 1, %s7
  %s10 = scalar_select 0, %s9, %s7
  %12 = dma.hbm_to_smem %s0, 16, [#allocation4], [#allocation3]
  %13 = dma.done [#allocation3], 16
  %14 = sfence
  $region1: #{tpu_custom_call.1} parent=0
    #allocation5 [shape = 'u8[131072]{0}', space=vmem, size = 0x20000, scoped, tag = 'input window, operand 1']
    #allocation6 [shape = 's32[2]{0}', space=sflag, size = 0x8, scoped, tag = 'scoped memory for tpu_custom_call.1']
    #allocation7 [shape = 's32[2]{0}', space=sflag, size = 0x8, scoped, tag = 'scoped memory for tpu_custom_call.1']
    #allocation8 [shape = 'u8[131072]{0}', space=vmem, size = 0x20000, scoped, tag = 'input window, operand 2']
    #allocation9 [shape = 's32[2]{0}', space=sflag, size = 0x8, scoped, tag = 'scoped memory for tpu_custom_call.1']
    #allocation10 [shape = 'u8[32768]{0}', space=vmem, size = 0x8000, scoped, tag = 'input window, operand 3, single buffered']
    #allocation11 [shape = 'u8[32768]{0}', space=vmem, size = 0x8000, scoped, tag = 'input window, operand 5, single buffered']
    #allocation12 [shape = 's32[1]{0}', space=sflag, size = 0x4, scoped, tag = 'scoped memory for tpu_custom_call.1']
    #allocation13 [shape = 'u8[65536]{0}', space=vmem, size = 0x10000, scoped, tag = 'output window, operand 0']
    %15 = vsyncpa [#allocation6], 0
    %s16 = scalar_lea.sflag [#allocation6], 1
    %17 = vsyncpa %s16, 0
    %18 = vsyncpa [#allocation9], 0
    %s19 = scalar_lea.sflag [#allocation9], 1
    %20 = vsyncpa %s19, 0
    %21 = vsyncpa [#allocation12], 0
    %22 = vsyncpa [#allocation7], 0
    %s23 = scalar_lea.sflag [#allocation7], 1
    %24 = vsyncpa %s23, 0
    loop: start=0, step=1, limit=10
    $region2: #{tpu_custom_call.1} parent=1 // loop_pre_header
      _
    $region3: #{tpu_custom_call.1} parent=1 // loop_header
      %s26 = sphi 0, %s30
      %p27 = scmp.ge.s32.totalorder %s26, 10
      %s33 = sphi 0, %s45
      %s34 = sphi 0, %s41
      %s35 = sphi 0, %s33
      %s36 = sphi 0, %s34
      %s37 = sphi 0, %s35
      %s38 = sphi 0, %s36
      %s56 = sphi 0, %s58
      %s59 = sphi 0, %s56
      %s60 = sphi 0, %s59
      %s76 = sphi 0, %s60
      %s88 = sphi 0, %s90
      %s91 = sphi 0, %s88
      %s92 = sphi 0, %s91
      %s108 = sphi 0, %s92
      %s112 = sphi 0, %s112
      %s114 = sphi 0, %s112
      %s115 = sphi 0, %s114
      %s129 = sphi 0, %s115
      %s133 = sphi 0, %s133
      %s135 = sphi 0, %s133
      %s136 = sphi 0, %s135
      %s150 = sphi 0, %s136
      %s154 = sphi 0, %s154
      %s156 = sphi 0, %s154
      %s157 = sphi 0, %s156
      %s171 = sphi 0, %s157
      %s177 = sphi 0, %s179
      %s180 = sphi 0, %s177
      %s181 = sphi 0, %s180
      %s197 = sphi 0, %s181
    $region4: #{tpu_custom_call.1} parent=1 // loop_header_branch
      %29 = sbr.rel (%p27) target = $region8
    $region5: #{tpu_custom_call.1} parent=1 // loop_body
      %s31 = ssub.s32 %s26, 1
      %s32 = ssub.s32 %s26, 2
      %s39 = sadd.s32 1, %s34
      %p40 = scmp.ge.s32.totalorder %s39, 2
      %s41 = scalar_select %p40, 0, %s39
      %s42 = sadd.s32 1, %s33
      %s43 = scalar_select %p40, %s42, %s33
      %p44 = scmp.ge.s32.totalorder %s43, 4
      %s45 = scalar_select %p44, 0, %s43
      %s46 = smul.u32 %s33, 2
      %s47 = sadd.s32 %s46, %s34
      %s48 = sld [smem:[#allocation4 + %s47]]
      %s49 = smul.u32 %s45, 2
      %s50 = sadd.s32 %s49, %s41
      %s51 = sld [smem:[#allocation4 + %s50]]
      %s52 = ssub.s32 %s33, %s45
      %s53 = ssub.s32 %s48, %s51
      %s54 = sor.u32 %s52, %s53
      %p55 = scmp.eq.s32.totalorder %s54, 0
      %s57 = sadd.s32 %s56, 1
      %s58 = scalar_select %p55, %s56, %s57
      %p61 = pneg %p55
      %p62 = scmp.eq.s32.totalorder %s26, 7
      %p63 = por %p61, %p62
      %p64 = scmp.ne.s32.totalorder %s56, %s59
      %p65 = scmp.eq.s32.totalorder %s26, 0
      %p66 = por %p64, %p65
      %p67 = scmp.ne.s32.totalorder %s56, %s59
      %p68 = scmp.eq.s32.totalorder %s31, 7
      %p69 = por %p67, %p68
      %p70 = scmp.ne.s32.totalorder %s59, %s60
      %p71 = scmp.eq.s32.totalorder %s31, 0
      %p72 = por %p70, %p71
      %p73 = scmp.ne.s32.totalorder %s59, %s60
      %p74 = scmp.eq.s32.totalorder %s32, 7
      %p75 = por %p73, %p74
      %p77 = scmp.ne.s32.totalorder %s60, %s76
      %p78 = scmp.eq.s32.totalorder %s32, 0
      %p79 = por %p77, %p78
      %s80 = smul.u32 %s33, 2
      %s81 = sadd.s32 %s80, %s34
      %s82 = sld [smem:[#allocation4 + %s81]]
      %s83 = smul.u32 %s45, 2
      %s84 = sadd.s32 %s83, %s41
      %s85 = sld [smem:[#allocation4 + %s84]]
      %s86 = ssub.s32 %s82, %s85
      %p87 = scmp.eq.s32.totalorder %s86, 0
      %s89 = sadd.s32 %s88, 1
      %s90 = scalar_select %p87, %s88, %s89
      %p93 = pneg %p87
      %p94 = scmp.eq.s32.totalorder %s26, 7
      %p95 = por %p93, %p94
      %p96 = scmp.ne.s32.totalorder %s88, %s91
      %p97 = scmp.eq.s32.totalorder %s26, 0
      %p98 = por %p96, %p97
      %p99 = scmp.ne.s32.totalorder %s88, %s91
      %p100 = scmp.eq.s32.totalorder %s31, 7
      %p101 = por %p99, %p100
      %p102 = scmp.ne.s32.totalorder %s91, %s92
      %p103 = scmp.eq.s32.totalorder %s31, 0
      %p104 = por %p102, %p103
      %p105 = scmp.ne.s32.totalorder %s91, %s92
      %p106 = scmp.eq.s32.totalorder %s32, 7
      %p107 = por %p105, %p106
      %p109 = scmp.ne.s32.totalorder %s92, %s108
      %p110 = scmp.eq.s32.totalorder %s32, 0
      %p111 = por %p109, %p110
      %s113 = sadd.s32 %s112, 1
      %p116 = scmp.eq.s32.totalorder %s26, 7
      %p117 = scmp.ne.s32.totalorder %s112, %s114
      %p118 = scmp.eq.s32.totalorder %s26, 0
      %p119 = por %p117, %p118
      %p120 = scmp.ne.s32.totalorder %s112, %s114
      %p121 = scmp.eq.s32.totalorder %s31, 7
      %p122 = por %p120, %p121
      %p123 = scmp.ne.s32.totalorder %s114, %s115
      %p124 = scmp.eq.s32.totalorder %s31, 0
      %p125 = por %p123, %p124
      %p126 = scmp.ne.s32.totalorder %s114, %s115
      %p127 = scmp.eq.s32.totalorder %s32, 7
      %p128 = por %p126, %p127
      %p130 = scmp.ne.s32.totalorder %s115, %s129
      %p131 = scmp.eq.s32.totalorder %s32, 0
      %p132 = por %p130, %p131
      %s134 = sadd.s32 %s133, 1
      %p137 = scmp.eq.s32.totalorder %s26, 7
      %p138 = scmp.ne.s32.totalorder %s133, %s135
      %p139 = scmp.eq.s32.totalorder %s26, 0
      %p140 = por %p138, %p139
      %p141 = scmp.ne.s32.totalorder %s133, %s135
      %p142 = scmp.eq.s32.totalorder %s31, 7
      %p143 = por %p141, %p142
      %p144 = scmp.ne.s32.totalorder %s135, %s136
      %p145 = scmp.eq.s32.totalorder %s31, 0
      %p146 = por %p144, %p145
      %p147 = scmp.ne.s32.totalorder %s135, %s136
      %p148 = scmp.eq.s32.totalorder %s32, 7
      %p149 = por %p147, %p148
      %p151 = scmp.ne.s32.totalorder %s136, %s150
      %p152 = scmp.eq.s32.totalorder %s32, 0
      %p153 = por %p151, %p152
      %s155 = sadd.s32 %s154, 1
      %p158 = scmp.eq.s32.totalorder %s26, 7
      %p159 = scmp.ne.s32.totalorder %s154, %s156
      %p160 = scmp.eq.s32.totalorder %s26, 0
      %p161 = por %p159, %p160
      %p162 = scmp.ne.s32.totalorder %s154, %s156
      %p163 = scmp.eq.s32.totalorder %s31, 7
      %p164 = por %p162, %p163
      %p165 = scmp.ne.s32.totalorder %s156, %s157
      %p166 = scmp.eq.s32.totalorder %s31, 0
      %p167 = por %p165, %p166
      %p168 = scmp.ne.s32.totalorder %s156, %s157
      %p169 = scmp.eq.s32.totalorder %s32, 7
      %p170 = por %p168, %p169
      %p172 = scmp.ne.s32.totalorder %s157, %s171
      %p173 = scmp.eq.s32.totalorder %s32, 0
      %p174 = por %p172, %p173
      %s175 = ssub.s32 %s33, %s45
      %p176 = scmp.eq.s32.totalorder %s175, 0
      %s178 = sadd.s32 %s177, 1
      %s179 = scalar_select %p176, %s177, %s178
      %p182 = pneg %p176
      %p183 = scmp.eq.s32.totalorder %s26, 7
      %p184 = por %p182, %p183
      %p185 = scmp.ne.s32.totalorder %s177, %s180
      %p186 = scmp.eq.s32.totalorder %s26, 0
      %p187 = por %p185, %p186
      %p188 = scmp.ne.s32.totalorder %s177, %s180
      %p189 = scmp.eq.s32.totalorder %s31, 7
      %p190 = por %p188, %p189
      %p191 = scmp.ne.s32.totalorder %s180, %s181
      %p192 = scmp.eq.s32.totalorder %s31, 0
      %p193 = por %p191, %p192
      %p194 = scmp.ne.s32.totalorder %s180, %s181
      %p195 = scmp.eq.s32.totalorder %s32, 7
      %p196 = por %p194, %p195
      %p198 = scmp.ne.s32.totalorder %s181, %s197
      %p199 = scmp.eq.s32.totalorder %s32, 0
      %p200 = por %p198, %p199
      %p201 = scmp.le.s32.totalorder 1, %s26
      %p202 = scmp.lt.s32.totalorder %s26, 9
      %p203 = pnand %p201, %p202
      %p204 = pneg %p203
      // Predicated region
      $region9: #{tpu_custom_call.1} parent=5 // pred_check
        _
      $region10: #{tpu_custom_call.1} parent=5 // pred_check_branch
        %206 = sbr.rel (%p203) target = $region12
      $region11: #{tpu_custom_call.1} parent=5 // pred_region
        %s207 = ssub.s32 %s26, 1
        // Predicated region
        $region13: #{tpu_custom_call.1} parent=11 // pred_check
          %p208 = pneg %p125
        $region14: #{tpu_custom_call.1} parent=11 // pred_check_branch
          %210 = sbr.rel (%p208) target = $region16
        $region15: #{tpu_custom_call.1} parent=11 // pred_region
          %s212 = ssub.s32 1024, 1024
          %213 = vsyncadd [#allocation9], %s212
          %s214 = sshll.u32 [#allocation10], 4
          %s215 = int_to_ptr.vmem [resolvable:$true] %s214
          %220 = dma.hbm_to_vmem [thread:$0]  %s3, 1024, %s215, [#allocation9], 64, 64, 4
        $region16: #{tpu_custom_call.1} parent=11 // pred_fallthru
          _
        // Predicated region
        $region17: #{tpu_custom_call.1} parent=11 // pred_check
          %p221 = pneg %p146
        $region18: #{tpu_custom_call.1} parent=11 // pred_check_branch
          %223 = sbr.rel (%p221) target = $region20
        $region19: #{tpu_custom_call.1} parent=11 // pred_region
          _
        $region20: #{tpu_custom_call.1} parent=11 // pred_fallthru
          _
        // Predicated region
        $region21: #{tpu_custom_call.1} parent=11 // pred_check
          %p224 = pneg %p167
        $region22: #{tpu_custom_call.1} parent=11 // pred_check_branch
          %226 = sbr.rel (%p224) target = $region24
        $region23: #{tpu_custom_call.1} parent=11 // pred_region
          %s228 = ssub.s32 1024, 1024
          %229 = vsyncadd [#allocation12], %s228
          %s230 = sshll.u32 [#allocation11], 4
          %s231 = int_to_ptr.vmem [resolvable:$true] %s230
          %236 = dma.hbm_to_vmem [thread:$0]  %s5, 1024, %s231, [#allocation12], 64, 64, 4
        $region24: #{tpu_custom_call.1} parent=11 // pred_fallthru
          _
      $region12: #{tpu_custom_call.1} parent=5 // pred_fallthru
        _
      %p237 = scmp.lt.s32.totalorder %s26, 8
      // Predicated region
      $region25: #{tpu_custom_call.1} parent=5 // pred_check
        %p238 = pneg %p237
      $region26: #{tpu_custom_call.1} parent=5 // pred_check_branch
        %240 = sbr.rel (%p238) target = $region28
      $region27: #{tpu_custom_call.1} parent=5 // pred_region
        // Predicated region
        $region29: #{tpu_custom_call.1} parent=27 // pred_check
          %p241 = pneg %p66
        $region30: #{tpu_custom_call.1} parent=27 // pred_check_branch
          %243 = sbr.rel (%p241) target = $region32
        $region31: #{tpu_custom_call.1} parent=27 // pred_region
          %s244 = sand.u32 %s56, 1
          %s245 = scalar_lea.sflag [#allocation6], %s244
          %s246 = sand.u32 %s56, 1
          %s247 = smul.addr %s246, 128
          %s248 = scalar_lea.vmem [#allocation5], %s247
          %s249 = smul.u32 %s33, 2
          %s250 = sadd.s32 %s249, %s34
          %s251 = sld [smem:[#allocation4 + %s250]]
          %s252 = smul.u32 16, %s33
          %s253 = smul.u32 2, %s251
          %s255 = ssub.s32 2048, 2048
          %256 = vsyncadd %s245, %s255
          %s257 = smul.addr %s252, 4
          %s258 = sadd.s32 %s253, %s257
          %s259 = smul.addr %s258, 64
          %s260 = scalar_lea.hbm %s1, %s259
          %s261 = sshll.u32 %s248, 4
          %s262 = int_to_ptr.vmem [resolvable:$true] %s261
          %267 = dma.hbm_to_vmem [thread:$0]  %s260, 2048, %s262, %s245, 256, 128, 8
        $region32: #{tpu_custom_call.1} parent=27 // pred_fallthru
          _
        // Predicated region
        $region33: #{tpu_custom_call.1} parent=27 // pred_check
          %p268 = pneg %p98
        $region34: #{tpu_custom_call.1} parent=27 // pred_check_branch
          %270 = sbr.rel (%p268) target = $region36
        $region35: #{tpu_custom_call.1} parent=27 // pred_region
          %s271 = sand.u32 %s26, 1
          %s272 = scalar_lea.sflag [#allocation9], %s271
          %s273 = sand.u32 %s88, 1
          %s274 = smul.addr %s273, 128
          %s275 = scalar_lea.vmem [#allocation8], %s274
          %s276 = smul.u32 %s33, 2
          %s277 = sadd.s32 %s276, %s34
          %s278 = sld [smem:[#allocation4 + %s277]]
          %s279 = smul.u32 32, %s278
          %s281 = ssub.s32 2048, 2048
          %282 = vsyncadd %s272, %s281
          %s283 = smul.addr %s279, 64
          %s284 = scalar_lea.hbm %s2, %s283
          %s285 = sshll.u32 %s275, 4
          %s286 = int_to_ptr.vmem [resolvable:$true] %s285
          %291 = dma.hbm_to_vmem [thread:$0]  %s284, 2048, %s286, %s272, 64, 64, 4
        $region36: #{tpu_custom_call.1} parent=27 // pred_fallthru
          _
      $region28: #{tpu_custom_call.1} parent=5 // pred_fallthru
        _
      %p292 = scmp.le.s32.totalorder 1, %s26
      %p293 = scmp.lt.s32.totalorder %s26, 9
      %p294 = pnand %p292, %p293
      %p295 = pneg %p294
      // Predicated region
      $region37: #{tpu_custom_call.1} parent=5 // pred_check
        _
      $region38: #{tpu_custom_call.1} parent=5 // pred_check_branch
        %297 = sbr.rel (%p294) target = $region40
      $region39: #{tpu_custom_call.1} parent=5 // pred_region
        %s298 = ssub.s32 %s26, 1
        %s299 = sand.u32 %s59, 1
        %s300 = scalar_lea.sflag [#allocation6], %s299
        %s301 = sand.u32 %s59, 1
        %s302 = smul.addr %s301, 128
        %s303 = scalar_lea.vmem [#allocation5], %s302
        // Predicated region
        $region41: #{tpu_custom_call.1} parent=39 // pred_check
          %p304 = pneg %p72
        $region42: #{tpu_custom_call.1} parent=39 // pred_check_branch
          %306 = sbr.rel (%p304) target = $region44
        $region43: #{tpu_custom_call.1} parent=39 // pred_region
          %307 = dma.done %s300, 2048
        $region44: #{tpu_custom_call.1} parent=39 // pred_fallthru
          _
        %s308 = sand.u32 %s31, 1
        %s309 = scalar_lea.sflag [#allocation9], %s308
        %s310 = sand.u32 %s91, 1
        %s311 = smul.addr %s310, 128
        %s312 = scalar_lea.vmem [#allocation8], %s311
        // Predicated region
        $region45: #{tpu_custom_call.1} parent=39 // pred_check
          %p313 = pneg %p104
        $region46: #{tpu_custom_call.1} parent=39 // pred_check_branch
          %315 = sbr.rel (%p313) target = $region48
        $region47: #{tpu_custom_call.1} parent=39 // pred_region
          %316 = dma.done %s309, 2048
        $region48: #{tpu_custom_call.1} parent=39 // pred_fallthru
          _
        // Predicated region
        $region49: #{tpu_custom_call.1} parent=39 // pred_check
          %p317 = pneg %p125
        $region50: #{tpu_custom_call.1} parent=39 // pred_check_branch
          %319 = sbr.rel (%p317) target = $region52
        $region51: #{tpu_custom_call.1} parent=39 // pred_region
          %320 = dma.done [#allocation9], 1024
        $region52: #{tpu_custom_call.1} parent=39 // pred_fallthru
          _
        // Predicated region
        $region53: #{tpu_custom_call.1} parent=39 // pred_check
          %p321 = pneg %p167
        $region54: #{tpu_custom_call.1} parent=39 // pred_check_branch
          %323 = sbr.rel (%p321) target = $region56
        $region55: #{tpu_custom_call.1} parent=39 // pred_region
          %324 = dma.done [#allocation12], 1024
        $region56: #{tpu_custom_call.1} parent=39 // pred_fallthru
          _
        %s325 = sand.u32 %s59, 1
        %s326 = scalar_lea.sflag [#allocation6], %s325
        %s327 = sand.u32 %s59, 1
        %s328 = smul.addr %s327, 128
        %s329 = scalar_lea.vmem [#allocation5], %s328
        %p330 = pneg %p72
        %p331 = pneg %p69
        %s332 = sand.u32 %s31, 1
        %s333 = scalar_lea.sflag [#allocation9], %s332
        %s334 = sand.u32 %s91, 1
        %s335 = smul.addr %s334, 128
        %s336 = scalar_lea.vmem [#allocation8], %s335
        %p337 = pneg %p104
        %p338 = pneg %p101
        %p339 = pneg %p125
        %p340 = pneg %p122
        %p341 = pneg %p146
        %p342 = pneg %p143
        %p343 = pneg %p167
        %p344 = pneg %p164
        %p345 = pneg %p193
        %p346 = pneg %p190
        %s347 = sand.u32 %s180, 1
        %s348 = scalar_lea.sflag [#allocation7], %s347
        %s349 = sand.u32 %s180, 1
        %s350 = smul.addr %s349, 64
        %s351 = scalar_lea.vmem [#allocation13], %s350
        %s352 = smul.u32 %s35, 2
        %s353 = sadd.s32 %s352, %s36
        %s354 = sld [smem:[#allocation4 + %s353]]
        %s355 = smul.u32 16, %s35
        %s356 = smul.u32 2, %s354
        %s357 = smul.u32 %s35, 2
        %s358 = sadd.s32 %s357, %s36
        %s359 = sld [smem:[#allocation4 + %s358]]
        %s360 = smul.u32 32, %s359
        %s361 = smul.u32 16, %s35
        %p363 = scmp.eq.s32.totalorder %s36, 0
        // Predicated region
        $region57: #{tpu_custom_call.1} parent=39 // pred_check
          %p364 = pneg %p363
        $region58: #{tpu_custom_call.1} parent=39 // pred_check_branch
          %366 = sbr.rel (%p364) target = $region60
        $region59: #{tpu_custom_call.1} parent=39 // pred_region
          %367 = vst [vmem:[#allocation2] sm:$0xff] 0.0
          %368 = vst [vmem:[#allocation2 + $0x8] sm:$0xff] 0.0
          %369 = vst [vmem:[#allocation2 + $0x10] sm:$0xff] 0.0
          %370 = vst [vmem:[#allocation2 + $0x18] sm:$0xff] 0.0
          %371 = vst [vmem:[#allocation2 + $0x20] sm:$0xff] 0.0
          %372 = vst [vmem:[#allocation2 + $0x28] sm:$0xff] 0.0
          %373 = vst [vmem:[#allocation2 + $0x30] sm:$0xff] 0.0
          %374 = vst [vmem:[#allocation2 + $0x38] sm:$0xff] 0.0
          %375 = vst [vmem:[#allocation2 + $0x40] sm:$0xff] 0.0
          %376 = vst [vmem:[#allocation2 + $0x48] sm:$0xff] 0.0
          %377 = vst [vmem:[#allocation2 + $0x50] sm:$0xff] 0.0
          %378 = vst [vmem:[#allocation2 + $0x58] sm:$0xff] 0.0
          %379 = vst [vmem:[#allocation2 + $0x60] sm:$0xff] 0.0
          %380 = vst [vmem:[#allocation2 + $0x68] sm:$0xff] 0.0
          %381 = vst [vmem:[#allocation2 + $0x70] sm:$0xff] 0.0
          %382 = vst [vmem:[#allocation2 + $0x78] sm:$0xff] 0.0
        $region60: #{tpu_custom_call.1} parent=39 // pred_fallthru
          _
        %s383 = smul.u32 %s35, 2
        %s384 = sadd.s32 %s383, %s36
        %s385 = sld [smem:[#allocation4 + %s384]]
        %p386 = scmp.eq.s32.totalorder %s385, %s36
        // Predicated region
        $region61: #{tpu_custom_call.1} parent=39 // pred_check
          %p387 = pneg %p386
        $region62: #{tpu_custom_call.1} parent=39 // pred_check_branch
          %389 = sbr.rel (%p387) target = $region64
        $region63: #{tpu_custom_call.1} parent=39 // pred_region
          %v390 = vld [vmem:[#allocation2] sm:$0xff]
          %v391 = vld [vmem:[#allocation2 + $0x8] sm:$0xff]
          %v392 = vld [vmem:[#allocation2 + $0x10] sm:$0xff]
          %v393 = vld [vmem:[#allocation2 + $0x18] sm:$0xff]
          %v394 = vld [vmem:[#allocation2 + $0x20] sm:$0xff]
          %v395 = vld [vmem:[#allocation2 + $0x28] sm:$0xff]
          %v396 = vld [vmem:[#allocation2 + $0x30] sm:$0xff]
          %v397 = vld [vmem:[#allocation2 + $0x38] sm:$0xff]
          %v398 = vld [vmem:[#allocation2 + $0x40] sm:$0xff]
          %v399 = vld [vmem:[#allocation2 + $0x48] sm:$0xff]
          %v400 = vld [vmem:[#allocation2 + $0x50] sm:$0xff]
          %v401 = vld [vmem:[#allocation2 + $0x58] sm:$0xff]
          %v402 = vld [vmem:[#allocation2 + $0x60] sm:$0xff]
          %v403 = vld [vmem:[#allocation2 + $0x68] sm:$0xff]
          %v404 = vld [vmem:[#allocation2 + $0x70] sm:$0xff]
          %v405 = vld [vmem:[#allocation2 + $0x78] sm:$0xff]
          %v406 = vld [vmem:[%s303] sm:$0xff]
          %v407 = vld [vmem:[%s303 + $0x8] sm:$0xff]
          %v408 = vld [vmem:[%s303 + $0x10] sm:$0xff]
          %v409 = vld [vmem:[%s303 + $0x18] sm:$0xff]
          %v410 = vld [vmem:[%s303 + $0x20] sm:$0xff]
          %v411 = vld [vmem:[%s303 + $0x28] sm:$0xff]
          %v412 = vld [vmem:[%s303 + $0x30] sm:$0xff]
          %v413 = vld [vmem:[%s303 + $0x38] sm:$0xff]
          %v414 = vld [vmem:[%s303 + $0x40] sm:$0xff]
          %v415 = vld [vmem:[%s303 + $0x48] sm:$0xff]
          %v416 = vld [vmem:[%s303 + $0x50] sm:$0xff]
          %v417 = vld [vmem:[%s303 + $0x58] sm:$0xff]
          %v418 = vld [vmem:[%s303 + $0x60] sm:$0xff]
          %v419 = vld [vmem:[%s303 + $0x68] sm:$0xff]
          %v420 = vld [vmem:[%s303 + $0x70] sm:$0xff]
          %v421 = vld [vmem:[%s303 + $0x78] sm:$0xff]
          %v422 = vld [vmem:[%s312] sm:$0xf]
          %v423 = vld [vmem:[%s312 + $0x4] sm:$0xf]
          %v424 = vld [vmem:[%s312 + $0x8] sm:$0xf]
          %v425 = vld [vmem:[%s312 + $0xc] sm:$0xf]
          %v426 = vld [vmem:[%s312 + $0x10] sm:$0xf]
          %v427 = vld [vmem:[%s312 + $0x14] sm:$0xf]
          %v428 = vld [vmem:[%s312 + $0x18] sm:$0xf]
          %v429 = vld [vmem:[%s312 + $0x1c] sm:$0xf]
          %v430 = vld [vmem:[%s312 + $0x20] sm:$0xf]
          %v431 = vld [vmem:[%s312 + $0x24] sm:$0xf]
          %v432 = vld [vmem:[%s312 + $0x28] sm:$0xf]
          %v433 = vld [vmem:[%s312 + $0x2c] sm:$0xf]
          %v434 = vld [vmem:[%s312 + $0x30] sm:$0xf]
          %v435 = vld [vmem:[%s312 + $0x34] sm:$0xf]
          %v436 = vld [vmem:[%s312 + $0x38] sm:$0xf]
          %v437 = vld [vmem:[%s312 + $0x3c] sm:$0xf]
          %v438 = vld [vmem:[%s312 + $0x40] sm:$0xf]
          %v439 = vld [vmem:[%s312 + $0x44] sm:$0xf]
          %v440 = vld [vmem:[%s312 + $0x48] sm:$0xf]
          %v441 = vld [vmem:[%s312 + $0x4c] sm:$0xf]
          %v442 = vld [vmem:[%s312 + $0x50] sm:$0xf]
          %v443 = vld [vmem:[%s312 + $0x54] sm:$0xf]
          %v444 = vld [vmem:[%s312 + $0x58] sm:$0xf]
          %v445 = vld [vmem:[%s312 + $0x5c] sm:$0xf]
          %v446 = vld [vmem:[%s312 + $0x60] sm:$0xf]
          %v447 = vld [vmem:[%s312 + $0x64] sm:$0xf]
          %v448 = vld [vmem:[%s312 + $0x68] sm:$0xf]
          %v449 = vld [vmem:[%s312 + $0x6c] sm:$0xf]
          %v450 = vld [vmem:[%s312 + $0x70] sm:$0xf]
          %v451 = vld [vmem:[%s312 + $0x74] sm:$0xf]
          %v452 = vld [vmem:[%s312 + $0x78] sm:$0xf]
          %v453 = vld [vmem:[%s312 + $0x7c] sm:$0xf]
          %v470 = vunpack.c.l.b16 %v406
          %v471 = vunpack.c.h.b16 %v406
          %v472 = vunpack.c.l.b16 %v407
          %v473 = vunpack.c.h.b16 %v407
          %v474 = vunpack.c.l.b16 %v408
          %v475 = vunpack.c.h.b16 %v408
          %v476 = vunpack.c.l.b16 %v409
          %v477 = vunpack.c.h.b16 %v409
          %v478 = vunpack.c.l.b16 %v410
          %v479 = vunpack.c.h.b16 %v410
          %v480 = vunpack.c.l.b16 %v411
          %v481 = vunpack.c.h.b16 %v411
          %v482 = vunpack.c.l.b16 %v412
          %v483 = vunpack.c.h.b16 %v412
          %v484 = vunpack.c.l.b16 %v413
          %v485 = vunpack.c.h.b16 %v413
          %v486 = vunpack.c.l.b16 %v414
          %v487 = vunpack.c.h.b16 %v414
          %v488 = vunpack.c.l.b16 %v415
          %v489 = vunpack.c.h.b16 %v415
          %v490 = vunpack.c.l.b16 %v416
          %v491 = vunpack.c.h.b16 %v416
          %v492 = vunpack.c.l.b16 %v417
          %v493 = vunpack.c.h.b16 %v417
          %v494 = vunpack.c.l.b16 %v418
          %v495 = vunpack.c.h.b16 %v418
          %v496 = vunpack.c.l.b16 %v419
          %v497 = vunpack.c.h.b16 %v419
          %v498 = vunpack.c.l.b16 %v420
          %v499 = vunpack.c.h.b16 %v420
          %v500 = vunpack.c.l.b16 %v421
          %v501 = vunpack.c.h.b16 %v421
          %v502 = vpack.c.b16 %v472, %v470
          %v503 = vpack.c.b16 %v473, %v471
          %v504 = vpack.c.b16 %v476, %v474
          %v505 = vpack.c.b16 %v477, %v475
          %v506 = vpack.c.b16 %v480, %v478
          %v507 = vpack.c.b16 %v481, %v479
          %v508 = vpack.c.b16 %v484, %v482
          %v509 = vpack.c.b16 %v485, %v483
          %v510 = vpack.c.b16 %v488, %v486
          %v511 = vpack.c.b16 %v489, %v487
          %v512 = vpack.c.b16 %v492, %v490
          %v513 = vpack.c.b16 %v493, %v491
          %v514 = vpack.c.b16 %v496, %v494
          %v515 = vpack.c.b16 %v497, %v495
          %v516 = vpack.c.b16 %v500, %v498
          %v517 = vpack.c.b16 %v501, %v499
          %v566 = vunpack.c.l.b16 %v422
          %v567 = vunpack.c.l.b16 %v423
          %v568 = vunpack.c.l.b16 %v424
          %v569 = vunpack.c.l.b16 %v425
          %v570 = vunpack.c.l.b16 %v426
          %v571 = vunpack.c.l.b16 %v427
          %v572 = vunpack.c.l.b16 %v428
          %v573 = vunpack.c.l.b16 %v429
          %v574 = vunpack.c.l.b16 %v430
          %v575 = vunpack.c.l.b16 %v431
          %v576 = vunpack.c.l.b16 %v432
          %v577 = vunpack.c.l.b16 %v433
          %v578 = vunpack.c.l.b16 %v434
          %v579 = vunpack.c.l.b16 %v435
          %v580 = vunpack.c.l.b16 %v436
          %v581 = vunpack.c.l.b16 %v437
          %v582 = vunpack.c.l.b16 %v438
          %v583 = vunpack.c.l.b16 %v439
          %v584 = vunpack.c.l.b16 %v440
          %v585 = vunpack.c.l.b16 %v441
          %v586 = vunpack.c.l.b16 %v442
          %v587 = vunpack.c.l.b16 %v443
          %v588 = vunpack.c.l.b16 %v444
          %v589 = vunpack.c.l.b16 %v445
          %v590 = vunpack.c.l.b16 %v446
          %v591 = vunpack.c.l.b16 %v447
          %v592 = vunpack.c.l.b16 %v448
          %v593 = vunpack.c.l.b16 %v449
          %v594 = vunpack.c.l.b16 %v450
          %v595 = vunpack.c.l.b16 %v451
          %v596 = vunpack.c.l.b16 %v452
          %v597 = vunpack.c.l.b16 %v453
          %v598 = vpack.c.b16 %v567, %v566
          %v599 = vpack.c.b16 %v569, %v568
          %v600 = vpack.c.b16 %v571, %v570
          %v601 = vpack.c.b16 %v573, %v572
          %v602 = vpack.c.b16 %v575, %v574
          %v603 = vpack.c.b16 %v577, %v576
          %v604 = vpack.c.b16 %v579, %v578
          %v605 = vpack.c.b16 %v581, %v580
          %v606 = vpack.c.b16 %v583, %v582
          %v607 = vpack.c.b16 %v585, %v584
          %v608 = vpack.c.b16 %v587, %v586
          %v609 = vpack.c.b16 %v589, %v588
          %v610 = vpack.c.b16 %v591, %v590
          %v611 = vpack.c.b16 %v593, %v592
          %v612 = vpack.c.b16 %v595, %v594
          %v613 = vpack.c.b16 %v597, %v596
          %630 = vmatprep.subr.bf16.mxu0 0
          %631 = vmatpush1.bf16.msra.mxu0 %v598
          %632 = vmatprep.subr.bf16.mxu0 0
          %633 = vmatpush1.bf16.msra.mxu0 %v599
          %634 = vmatprep.subr.bf16.mxu0 0
          %635 = vmatpush1.bf16.msra.mxu0 %v600
          %636 = vmatprep.subr.bf16.mxu0 0
          %637 = vmatpush1.bf16.msra.mxu0 %v601
          %638 = vmatprep.subr.bf16.mxu0 0
          %639 = vmatpush1.bf16.msra.mxu0 %v602
          %640 = vmatprep.subr.bf16.mxu0 0
          %641 = vmatpush1.bf16.msra.mxu0 %v603
          %642 = vmatprep.subr.bf16.mxu0 0
          %643 = vmatpush1.bf16.msra.mxu0 %v604
          %644 = vmatprep.subr.bf16.mxu0 0
          %645 = vmatpush1.bf16.msra.mxu0 %v605
          %646 = vmatprep.subr.bf16.mxu0 0
          %647 = vmatpush1.bf16.msra.mxu0 %v606
          %648 = vmatprep.subr.bf16.mxu0 0
          %649 = vmatpush1.bf16.msra.mxu0 %v607
          %650 = vmatprep.subr.bf16.mxu0 0
          %651 = vmatpush1.bf16.msra.mxu0 %v608
          %652 = vmatprep.subr.bf16.mxu0 0
          %653 = vmatpush1.bf16.msra.mxu0 %v609
          %654 = vmatprep.subr.bf16.mxu0 0
          %655 = vmatpush1.bf16.msra.mxu0 %v610
          %656 = vmatprep.subr.bf16.mxu0 0
          %657 = vmatpush1.bf16.msra.mxu0 %v611
          %658 = vmatprep.subr.bf16.mxu0 0
          %659 = vmatpush1.bf16.msra.mxu0 %v612
          %660 = vmatprep.subr.bf16.mxu0 0
          %661 = vmatpush1.bf16.msra.mxu0 %v613
          %662 = vmatprep.mubr.bf16.mxu0 %v503
          %663 = vmatmul.mubr.bf16.gmra.mrb[0].mxu0 %v502
          %v664 = vpop.f32.mrb[0].mxu0
          %v665 = vadd.f32 0.0, %v664
          %v666 = vpop.f32.mrb[0].mxu0
          %v667 = vpop.f32.mrb[0].mxu0
          %v668 = vadd.f32 0.0, %v667
          %v669 = vpop.f32.mrb[0].mxu0
          %670 = vmatprep.mubr.bf16.mxu0 %v505
          %671 = vmatmul.mubr.bf16.gmra.mrb[0].mxu0 %v504
          %v672 = vpop.f32.mrb[0].mxu0
          %v673 = vadd.f32 0.0, %v672
          %v674 = vpop.f32.mrb[0].mxu0
          %v675 = vpop.f32.mrb[0].mxu0
          %v676 = vadd.f32 0.0, %v675
          %v677 = vpop.f32.mrb[0].mxu0
          %678 = vmatprep.mubr.bf16.mxu0 %v507
          %679 = vmatmul.mubr.bf16.gmra.mrb[0].mxu0 %v506
          %v680 = vpop.f32.mrb[0].mxu0
          %v681 = vadd.f32 0.0, %v680
          %v682 = vpop.f32.mrb[0].mxu0
          %v683 = vpop.f32.mrb[0].mxu0
          %v684 = vadd.f32 0.0, %v683
          %v685 = vpop.f32.mrb[0].mxu0
          %686 = vmatprep.mubr.bf16.mxu0 %v509
          %687 = vmatmul.mubr.bf16.gmra.mrb[0].mxu0 %v508
          %v688 = vpop.f32.mrb[0].mxu0
          %v689 = vadd.f32 0.0, %v688
          %v690 = vpop.f32.mrb[0].mxu0
          %v691 = vpop.f32.mrb[0].mxu0
          %v692 = vadd.f32 0.0, %v691
          %v693 = vpop.f32.mrb[0].mxu0
          %694 = vmatprep.mubr.bf16.mxu0 %v511
          %695 = vmatmul.mubr.bf16.gmra.mrb[0].mxu0 %v510
          %v696 = vpop.f32.mrb[0].mxu0
          %v697 = vadd.f32 0.0, %v696
          %v698 = vpop.f32.mrb[0].mxu0
          %v699 = vpop.f32.mrb[0].mxu0
          %v700 = vadd.f32 0.0, %v699
          %v701 = vpop.f32.mrb[0].mxu0
          %702 = vmatprep.mubr.bf16.mxu0 %v513
          %703 = vmatmul.mubr.bf16.gmra.mrb[0].mxu0 %v512
          %v704 = vpop.f32.mrb[0].mxu0
          %v705 = vadd.f32 0.0, %v704
          %v706 = vpop.f32.mrb[0].mxu0
          %v707 = vpop.f32.mrb[0].mxu0
          %v708 = vadd.f32 0.0, %v707
          %v709 = vpop.f32.mrb[0].mxu0
          %710 = vmatprep.mubr.bf16.mxu0 %v515
          %711 = vmatmul.mubr.bf16.gmra.mrb[0].mxu0 %v514
          %v712 = vpop.f32.mrb[0].mxu0
          %v713 = vadd.f32 0.0, %v712
          %v714 = vpop.f32.mrb[0].mxu0
          %v715 = vpop.f32.mrb[0].mxu0
          %v716 = vadd.f32 0.0, %v715
          %v717 = vpop.f32.mrb[0].mxu0
          %718 = vmatprep.mubr.bf16.mxu0 %v517
          %719 = vmatmul.mubr.bf16.gmra.mrb[0].mxu0 %v516
          %v720 = vpop.f32.mrb[0].mxu0
          %v721 = vadd.f32 0.0, %v720
          %v722 = vpop.f32.mrb[0].mxu0
          %v723 = vpop.f32.mrb[0].mxu0
          %v724 = vadd.f32 0.0, %v723
          %v725 = vpop.f32.mrb[0].mxu0
          %726 = vdwg.mxu0
          %v727 = vadd.f32 %v390, %v665
          %v728 = vadd.f32 %v391, %v668
          %v729 = vadd.f32 %v392, %v673
          %v730 = vadd.f32 %v393, %v676
          %v731 = vadd.f32 %v394, %v681
          %v732 = vadd.f32 %v395, %v684
          %v733 = vadd.f32 %v396, %v689
          %v734 = vadd.f32 %v397, %v692
          %v735 = vadd.f32 %v398, %v697
          %v736 = vadd.f32 %v399, %v700
          %v737 = vadd.f32 %v400, %v705
          %v738 = vadd.f32 %v401, %v708
          %v739 = vadd.f32 %v402, %v713
          %v740 = vadd.f32 %v403, %v716
          %v741 = vadd.f32 %v404, %v721
          %v742 = vadd.f32 %v405, %v724
          %743 = vst [vmem:[#allocation2] sm:$0xff] %v727
          %744 = vst [vmem:[#allocation2 + $0x8] sm:$0xff] %v728
          %745 = vst [vmem:[#allocation2 + $0x10] sm:$0xff] %v729
          %746 = vst [vmem:[#allocation2 + $0x18] sm:$0xff] %v730
          %747 = vst [vmem:[#allocation2 + $0x20] sm:$0xff] %v731
          %748 = vst [vmem:[#allocation2 + $0x28] sm:$0xff] %v732
          %749 = vst [vmem:[#allocation2 + $0x30] sm:$0xff] %v733
          %750 = vst [vmem:[#allocation2 + $0x38] sm:$0xff] %v734
          %751 = vst [vmem:[#allocation2 + $0x40] sm:$0xff] %v735
          %752 = vst [vmem:[#allocation2 + $0x48] sm:$0xff] %v736
          %753 = vst [vmem:[#allocation2 + $0x50] sm:$0xff] %v737
          %754 = vst [vmem:[#allocation2 + $0x58] sm:$0xff] %v738
          %755 = vst [vmem:[#allocation2 + $0x60] sm:$0xff] %v739
          %756 = vst [vmem:[#allocation2 + $0x68] sm:$0xff] %v740
          %757 = vst [vmem:[#allocation2 + $0x70] sm:$0xff] %v741
          %758 = vst [vmem:[#allocation2 + $0x78] sm:$0xff] %v742
        $region64: #{tpu_custom_call.1} parent=39 // pred_fallthru
          _
        %p759 = scmp.eq.s32.totalorder %s36, 1
        // Predicated region
        $region65: #{tpu_custom_call.1} parent=39 // pred_check
          %p760 = pneg %p759
        $region66: #{tpu_custom_call.1} parent=39 // pred_check_branch
          %762 = sbr.rel (%p760) target = $region68
        $region67: #{tpu_custom_call.1} parent=39 // pred_region
          %v763 = vld [vmem:[#allocation2] sm:$0xff]
          %v764 = vld [vmem:[#allocation2 + $0x8] sm:$0xff]
          %v765 = vld [vmem:[#allocation2 + $0x10] sm:$0xff]
          %v766 = vld [vmem:[#allocation2 + $0x18] sm:$0xff]
          %v767 = vld [vmem:[#allocation2 + $0x20] sm:$0xff]
          %v768 = vld [vmem:[#allocation2 + $0x28] sm:$0xff]
          %v769 = vld [vmem:[#allocation2 + $0x30] sm:$0xff]
          %v770 = vld [vmem:[#allocation2 + $0x38] sm:$0xff]
          %v771 = vld [vmem:[#allocation2 + $0x40] sm:$0xff]
          %v772 = vld [vmem:[#allocation2 + $0x48] sm:$0xff]
          %v773 = vld [vmem:[#allocation2 + $0x50] sm:$0xff]
          %v774 = vld [vmem:[#allocation2 + $0x58] sm:$0xff]
          %v775 = vld [vmem:[#allocation2 + $0x60] sm:$0xff]
          %v776 = vld [vmem:[#allocation2 + $0x68] sm:$0xff]
          %v777 = vld [vmem:[#allocation2 + $0x70] sm:$0xff]
          %v778 = vld [vmem:[#allocation2 + $0x78] sm:$0xff]
          %v779 = vpack.c.bf16 %v764, %v763
          %v780 = vpack.c.bf16 %v766, %v765
          %v781 = vpack.c.bf16 %v768, %v767
          %v782 = vpack.c.bf16 %v770, %v769
          %v783 = vpack.c.bf16 %v772, %v771
          %v784 = vpack.c.bf16 %v774, %v773
          %v785 = vpack.c.bf16 %v776, %v775
          %v786 = vpack.c.bf16 %v778, %v777
          %v787 = vld [vmem:[#allocation10] sm:$0xf]
          %v788 = vld [vmem:[#allocation10 + $0x4] sm:$0xf]
          %v789 = vld [vmem:[#allocation10 + $0x8] sm:$0xf]
          %v790 = vld [vmem:[#allocation10 + $0xc] sm:$0xf]
          %v791 = vld [vmem:[#allocation10 + $0x10] sm:$0xf]
          %v792 = vld [vmem:[#allocation10 + $0x14] sm:$0xf]
          %v793 = vld [vmem:[#allocation10 + $0x18] sm:$0xf]
          %v794 = vld [vmem:[#allocation10 + $0x1c] sm:$0xf]
          %v795 = vld [vmem:[#allocation10 + $0x20] sm:$0xf]
          %v796 = vld [vmem:[#allocation10 + $0x24] sm:$0xf]
          %v797 = vld [vmem:[#allocation10 + $0x28] sm:$0xf]
          %v798 = vld [vmem:[#allocation10 + $0x2c] sm:$0xf]
          %v799 = vld [vmem:[#allocation10 + $0x30] sm:$0xf]
          %v800 = vld [vmem:[#allocation10 + $0x34] sm:$0xf]
          %v801 = vld [vmem:[#allocation10 + $0x38] sm:$0xf]
          %v802 = vld [vmem:[#allocation10 + $0x3c] sm:$0xf]
          %v803 = vld [vmem:[%s4] sm:$0x1]
          %v805 = vlaneseq
          %v806 = vshrl.u32 %v805, 7
          %v807 = vsub.s32 0, %v806
          %v808 = vrot.slane %v803, %v807
          %v826 = vunpack.c.l.b16 %v787
          %v827 = vunpack.c.l.b16 %v788
          %v828 = vunpack.c.l.b16 %v789
          %v829 = vunpack.c.l.b16 %v790
          %v830 = vunpack.c.l.b16 %v791
          %v831 = vunpack.c.l.b16 %v792
          %v832 = vunpack.c.l.b16 %v793
          %v833 = vunpack.c.l.b16 %v794
          %v834 = vunpack.c.l.b16 %v795
          %v835 = vunpack.c.l.b16 %v796
          %v836 = vunpack.c.l.b16 %v797
          %v837 = vunpack.c.l.b16 %v798
          %v838 = vunpack.c.l.b16 %v799
          %v839 = vunpack.c.l.b16 %v800
          %v840 = vunpack.c.l.b16 %v801
          %v841 = vunpack.c.l.b16 %v802
          %v842 = vpack.c.b16 %v827, %v826
          %v843 = vpack.c.b16 %v829, %v828
          %v844 = vpack.c.b16 %v831, %v830
          %v845 = vpack.c.b16 %v833, %v832
          %v846 = vpack.c.b16 %v835, %v834
          %v847 = vpack.c.b16 %v837, %v836
          %v848 = vpack.c.b16 %v839, %v838
          %v849 = vpack.c.b16 %v841, %v840
          %858 = vmatprep.subr.bf16.mxu0 0
          %859 = vmatpush1.bf16.msra.mxu0 %v842
          %860 = vmatprep.subr.bf16.mxu0 0
          %861 = vmatpush1.bf16.msra.mxu0 %v843
          %862 = vmatprep.subr.bf16.mxu0 0
          %863 = vmatpush1.bf16.msra.mxu0 %v844
          %864 = vmatprep.subr.bf16.mxu0 0
          %865 = vmatpush1.bf16.msra.mxu0 %v845
          %866 = vmatprep.subr.bf16.mxu0 0
          %867 = vmatpush1.bf16.msra.mxu0 %v846
          %868 = vmatprep.subr.bf16.mxu0 0
          %869 = vmatpush1.bf16.msra.mxu0 %v847
          %870 = vmatprep.subr.bf16.mxu0 0
          %871 = vmatpush1.bf16.msra.mxu0 %v848
          %872 = vmatprep.subr.bf16.mxu0 0
          %873 = vmatpush1.bf16.msra.mxu0 %v849
          %874 = vmatprep.subr.bf16.mxu0 0
          %875 = vmatpush1.bf16.msra.mxu0 0
          %876 = vmatprep.subr.bf16.mxu0 0
          %877 = vmatpush1.bf16.msra.mxu0 0
          %878 = vmatprep.subr.bf16.mxu0 0
          %879 = vmatpush1.bf16.msra.mxu0 0
          %880 = vmatprep.subr.bf16.mxu0 0
          %881 = vmatpush1.bf16.msra.mxu0 0
          %882 = vmatprep.subr.bf16.mxu0 0
          %883 = vmatpush1.bf16.msra.mxu0 0
          %884 = vmatprep.subr.bf16.mxu0 0
          %885 = vmatpush1.bf16.msra.mxu0 0
          %886 = vmatprep.subr.bf16.mxu0 0
          %887 = vmatpush1.bf16.msra.mxu0 0
          %888 = vmatprep.subr.bf16.mxu0 0
          %889 = vmatpush1.bf16.msra.mxu0 0
          %890 = vmatprep.mubr.bf16.mxu0 0
          %891 = vmatmul.mubr.bf16.gmra.mrb[0].mxu0 %v779
          %v892 = vpop.f32.mrb[0].mxu0
          %v893 = vadd.f32 %v808, %v892
          %v894 = vpop.f32.mrb[0].mxu0
          %v895 = vpop.f32.mrb[0].mxu0
          %v896 = vadd.f32 %v808, %v895
          %v897 = vpop.f32.mrb[0].mxu0
          %898 = vmatprep.mubr.bf16.mxu0 0
          %899 = vmatmul.mubr.bf16.gmra.mrb[0].mxu0 %v780
          %v900 = vpop.f32.mrb[0].mxu0
          %v901 = vadd.f32 %v808, %v900
          %v902 = vpop.f32.mrb[0].mxu0
          %v903 = vpop.f32.mrb[0].mxu0
          %v904 = vadd.f32 %v808, %v903
          %v905 = vpop.f32.mrb[0].mxu0
          %906 = vmatprep.mubr.bf16.mxu0 0
          %907 = vmatmul.mubr.bf16.gmra.mrb[0].mxu0 %v781
          %v908 = vpop.f32.mrb[0].mxu0
          %v909 = vadd.f32 %v808, %v908
          %v910 = vpop.f32.mrb[0].mxu0
          %v911 = vpop.f32.mrb[0].mxu0
          %v912 = vadd.f32 %v808, %v911
          %v913 = vpop.f32.mrb[0].mxu0
          %914 = vmatprep.mubr.bf16.mxu0 0
          %915 = vmatmul.mubr.bf16.gmra.mrb[0].mxu0 %v782
          %v916 = vpop.f32.mrb[0].mxu0
          %v917 = vadd.f32 %v808, %v916
          %v918 = vpop.f32.mrb[0].mxu0
          %v919 = vpop.f32.mrb[0].mxu0
          %v920 = vadd.f32 %v808, %v919
          %v921 = vpop.f32.mrb[0].mxu0
          %922 = vmatprep.mubr.bf16.mxu0 0
          %923 = vmatmul.mubr.bf16.gmra.mrb[0].mxu0 %v783
          %v924 = vpop.f32.mrb[0].mxu0
          %v925 = vadd.f32 %v808, %v924
          %v926 = vpop.f32.mrb[0].mxu0
          %v927 = vpop.f32.mrb[0].mxu0
          %v928 = vadd.f32 %v808, %v927
          %v929 = vpop.f32.mrb[0].mxu0
          %930 = vmatprep.mubr.bf16.mxu0 0
          %931 = vmatmul.mubr.bf16.gmra.mrb[0].mxu0 %v784
          %v932 = vpop.f32.mrb[0].mxu0
          %v933 = vadd.f32 %v808, %v932
          %v934 = vpop.f32.mrb[0].mxu0
          %v935 = vpop.f32.mrb[0].mxu0
          %v936 = vadd.f32 %v808, %v935
          %v937 = vpop.f32.mrb[0].mxu0
          %938 = vmatprep.mubr.bf16.mxu0 0
          %939 = vmatmul.mubr.bf16.gmra.mrb[0].mxu0 %v785
          %v940 = vpop.f32.mrb[0].mxu0
          %v941 = vadd.f32 %v808, %v940
          %v942 = vpop.f32.mrb[0].mxu0
          %v943 = vpop.f32.mrb[0].mxu0
          %v944 = vadd.f32 %v808, %v943
          %v945 = vpop.f32.mrb[0].mxu0
          %946 = vmatprep.mubr.bf16.mxu0 0
          %947 = vmatmul.mubr.bf16.gmra.mrb[0].mxu0 %v786
          %v948 = vpop.f32.mrb[0].mxu0
          %v949 = vadd.f32 %v808, %v948
          %v950 = vpop.f32.mrb[0].mxu0
          %v951 = vpop.f32.mrb[0].mxu0
          %v952 = vadd.f32 %v808, %v951
          %v953 = vpop.f32.mrb[0].mxu0
          %954 = vdwg.mxu0
          %v955 = vmax.f32 %v893, 0.0
          %v956 = vmax.f32 %v896, 0.0
          %v957 = vmax.f32 %v901, 0.0
          %v958 = vmax.f32 %v904, 0.0
          %v959 = vmax.f32 %v909, 0.0
          %v960 = vmax.f32 %v912, 0.0
          %v961 = vmax.f32 %v917, 0.0
          %v962 = vmax.f32 %v920, 0.0
          %v963 = vmax.f32 %v925, 0.0
          %v964 = vmax.f32 %v928, 0.0
          %v965 = vmax.f32 %v933, 0.0
          %v966 = vmax.f32 %v936, 0.0
          %v967 = vmax.f32 %v941, 0.0
          %v968 = vmax.f32 %v944, 0.0
          %v969 = vmax.f32 %v949, 0.0
          %v970 = vmax.f32 %v952, 0.0
          %v971 = vpack.c.bf16 %v956, %v955
          %v972 = vpack.c.bf16 %v958, %v957
          %v973 = vpack.c.bf16 %v960, %v959
          %v974 = vpack.c.bf16 %v962, %v961
          %v975 = vpack.c.bf16 %v964, %v963
          %v976 = vpack.c.bf16 %v966, %v965
          %v977 = vpack.c.bf16 %v968, %v967
          %v978 = vpack.c.bf16 %v970, %v969
          %v979 = vld [vmem:[#allocation11] sm:$0xf]
          %v980 = vld [vmem:[#allocation11 + $0x4] sm:$0xf]
          %v981 = vld [vmem:[#allocation11 + $0x8] sm:$0xf]
          %v982 = vld [vmem:[#allocation11 + $0xc] sm:$0xf]
          %v983 = vld [vmem:[#allocation11 + $0x10] sm:$0xf]
          %v984 = vld [vmem:[#allocation11 + $0x14] sm:$0xf]
          %v985 = vld [vmem:[#allocation11 + $0x18] sm:$0xf]
          %v986 = vld [vmem:[#allocation11 + $0x1c] sm:$0xf]
          %v987 = vld [vmem:[#allocation11 + $0x20] sm:$0xf]
          %v988 = vld [vmem:[#allocation11 + $0x24] sm:$0xf]
          %v989 = vld [vmem:[#allocation11 + $0x28] sm:$0xf]
          %v990 = vld [vmem:[#allocation11 + $0x2c] sm:$0xf]
          %v991 = vld [vmem:[#allocation11 + $0x30] sm:$0xf]
          %v992 = vld [vmem:[#allocation11 + $0x34] sm:$0xf]
          %v993 = vld [vmem:[#allocation11 + $0x38] sm:$0xf]
          %v994 = vld [vmem:[#allocation11 + $0x3c] sm:$0xf]
          %v1011 = vunpack.c.l.b16 %v979
          %v1012 = vunpack.c.l.b16 %v980
          %v1013 = vunpack.c.l.b16 %v981
          %v1014 = vunpack.c.l.b16 %v982
          %v1015 = vunpack.c.l.b16 %v983
          %v1016 = vunpack.c.l.b16 %v984
          %v1017 = vunpack.c.l.b16 %v985
          %v1018 = vunpack.c.l.b16 %v986
          %v1019 = vunpack.c.l.b16 %v987
          %v1020 = vunpack.c.l.b16 %v988
          %v1021 = vunpack.c.l.b16 %v989
          %v1022 = vunpack.c.l.b16 %v990
          %v1023 = vunpack.c.l.b16 %v991
          %v1024 = vunpack.c.l.b16 %v992
          %v1025 = vunpack.c.l.b16 %v993
          %v1026 = vunpack.c.l.b16 %v994
          %v1027 = vpack.c.b16 %v1012, %v1011
          %v1028 = vpack.c.b16 %v1014, %v1013
          %v1029 = vpack.c.b16 %v1016, %v1015
          %v1030 = vpack.c.b16 %v1018, %v1017
          %v1031 = vpack.c.b16 %v1020, %v1019
          %v1032 = vpack.c.b16 %v1022, %v1021
          %v1033 = vpack.c.b16 %v1024, %v1023
          %v1034 = vpack.c.b16 %v1026, %v1025
          %1043 = vmatprep.subr.bf16.mxu0 0
          %1044 = vmatpush1.bf16.msra.mxu0 %v1027
          %1045 = vmatprep.subr.bf16.mxu0 0
          %1046 = vmatpush1.bf16.msra.mxu0 %v1028
          %1047 = vmatprep.subr.bf16.mxu0 0
          %1048 = vmatpush1.bf16.msra.mxu0 %v1029
          %1049 = vmatprep.subr.bf16.mxu0 0
          %1050 = vmatpush1.bf16.msra.mxu0 %v1030
          %1051 = vmatprep.subr.bf16.mxu0 0
          %1052 = vmatpush1.bf16.msra.mxu0 %v1031
          %1053 = vmatprep.subr.bf16.mxu0 0
          %1054 = vmatpush1.bf16.msra.mxu0 %v1032
          %1055 = vmatprep.subr.bf16.mxu0 0
          %1056 = vmatpush1.bf16.msra.mxu0 %v1033
          %1057 = vmatprep.subr.bf16.mxu0 0
          %1058 = vmatpush1.bf16.msra.mxu0 %v1034
          %1059 = vmatprep.subr.bf16.mxu0 0
          %1060 = vmatpush1.bf16.msra.mxu0 0
          %1061 = vmatprep.subr.bf16.mxu0 0
          %1062 = vmatpush1.bf16.msra.mxu0 0
          %1063 = vmatprep.subr.bf16.mxu0 0
          %1064 = vmatpush1.bf16.msra.mxu0 0
          %1065 = vmatprep.subr.bf16.mxu0 0
          %1066 = vmatpush1.bf16.msra.mxu0 0
          %1067 = vmatprep.subr.bf16.mxu0 0
          %1068 = vmatpush1.bf16.msra.mxu0 0
          %1069 = vmatprep.subr.bf16.mxu0 0
          %1070 = vmatpush1.bf16.msra.mxu0 0
          %1071 = vmatprep.subr.bf16.mxu0 0
          %1072 = vmatpush1.bf16.msra.mxu0 0
          %1073 = vmatprep.subr.bf16.mxu0 0
          %1074 = vmatpush1.bf16.msra.mxu0 0
          %1075 = vmatprep.mubr.bf16.mxu0 0
          %1076 = vmatmul.mubr.bf16.gmra.mrb[0].mxu0 %v971
          %v1077 = vpop.f32.mrb[0].mxu0
          %v1078 = vadd.f32 0.0, %v1077
          %v1079 = vpop.f32.mrb[0].mxu0
          %v1080 = vpop.f32.mrb[0].mxu0
          %v1081 = vadd.f32 0.0, %v1080
          %v1082 = vpop.f32.mrb[0].mxu0
          %1083 = vmatprep.mubr.bf16.mxu0 0
          %1084 = vmatmul.mubr.bf16.gmra.mrb[0].mxu0 %v972
          %v1085 = vpop.f32.mrb[0].mxu0
          %v1086 = vadd.f32 0.0, %v1085
          %v1087 = vpop.f32.mrb[0].mxu0
          %v1088 = vpop.f32.mrb[0].mxu0
          %v1089 = vadd.f32 0.0, %v1088
          %v1090 = vpop.f32.mrb[0].mxu0
          %1091 = vmatprep.mubr.bf16.mxu0 0
          %1092 = vmatmul.mubr.bf16.gmra.mrb[0].mxu0 %v973
          %v1093 = vpop.f32.mrb[0].mxu0
          %v1094 = vadd.f32 0.0, %v1093
          %v1095 = vpop.f32.mrb[0].mxu0
          %v1096 = vpop.f32.mrb[0].mxu0
          %v1097 = vadd.f32 0.0, %v1096
          %v1098 = vpop.f32.mrb[0].mxu0
          %1099 = vmatprep.mubr.bf16.mxu0 0
          %1100 = vmatmul.mubr.bf16.gmra.mrb[0].mxu0 %v974
          %v1101 = vpop.f32.mrb[0].mxu0
          %v1102 = vadd.f32 0.0, %v1101
          %v1103 = vpop.f32.mrb[0].mxu0
          %v1104 = vpop.f32.mrb[0].mxu0
          %v1105 = vadd.f32 0.0, %v1104
          %v1106 = vpop.f32.mrb[0].mxu0
          %1107 = vmatprep.mubr.bf16.mxu0 0
          %1108 = vmatmul.mubr.bf16.gmra.mrb[0].mxu0 %v975
          %v1109 = vpop.f32.mrb[0].mxu0
          %v1110 = vadd.f32 0.0, %v1109
          %v1111 = vpop.f32.mrb[0].mxu0
          %v1112 = vpop.f32.mrb[0].mxu0
          %v1113 = vadd.f32 0.0, %v1112
          %v1114 = vpop.f32.mrb[0].mxu0
          %1115 = vmatprep.mubr.bf16.mxu0 0
          %1116 = vmatmul.mubr.bf16.gmra.mrb[0].mxu0 %v976
          %v1117 = vpop.f32.mrb[0].mxu0
          %v1118 = vadd.f32 0.0, %v1117
          %v1119 = vpop.f32.mrb[0].mxu0
          %v1120 = vpop.f32.mrb[0].mxu0
          %v1121 = vadd.f32 0.0, %v1120
          %v1122 = vpop.f32.mrb[0].mxu0
          %1123 = vmatprep.mubr.bf16.mxu0 0
          %1124 = vmatmul.mubr.bf16.gmra.mrb[0].mxu0 %v977
          %v1125 = vpop.f32.mrb[0].mxu0
          %v1126 = vadd.f32 0.0, %v1125
          %v1127 = vpop.f32.mrb[0].mxu0
          %v1128 = vpop.f32.mrb[0].mxu0
          %v1129 = vadd.f32 0.0, %v1128
          %v1130 = vpop.f32.mrb[0].mxu0
          %1131 = vmatprep.mubr.bf16.mxu0 0
          %1132 = vmatmul.mubr.bf16.gmra.mrb[0].mxu0 %v978
          %v1133 = vpop.f32.mrb[0].mxu0
          %v1134 = vadd.f32 0.0, %v1133
          %v1135 = vpop.f32.mrb[0].mxu0
          %v1136 = vpop.f32.mrb[0].mxu0
          %v1137 = vadd.f32 0.0, %v1136
          %v1138 = vpop.f32.mrb[0].mxu0
          %1139 = vdwg.mxu0
          %v1140 = vpack.c.bf16 %v1081, %v1078
          %v1141 = vpack.c.bf16 %v1089, %v1086
          %v1142 = vpack.c.bf16 %v1097, %v1094
          %v1143 = vpack.c.bf16 %v1105, %v1102
          %v1144 = vpack.c.bf16 %v1113, %v1110
          %v1145 = vpack.c.bf16 %v1121, %v1118
          %v1146 = vpack.c.bf16 %v1129, %v1126
          %v1147 = vpack.c.bf16 %v1137, %v1134
          %v1156 = vunpack.c.l.b16 %v1140
          %v1157 = vunpack.c.h.b16 %v1140
          %v1158 = vunpack.c.l.b16 %v1141
          %v1159 = vunpack.c.h.b16 %v1141
          %v1160 = vunpack.c.l.b16 %v1142
          %v1161 = vunpack.c.h.b16 %v1142
          %v1162 = vunpack.c.l.b16 %v1143
          %v1163 = vunpack.c.h.b16 %v1143
          %v1164 = vunpack.c.l.b16 %v1144
          %v1165 = vunpack.c.h.b16 %v1144
          %v1166 = vunpack.c.l.b16 %v1145
          %v1167 = vunpack.c.h.b16 %v1145
          %v1168 = vunpack.c.l.b16 %v1146
          %v1169 = vunpack.c.h.b16 %v1146
          %v1170 = vunpack.c.l.b16 %v1147
          %v1171 = vunpack.c.h.b16 %v1147
          %v1172 = vpack.c.b16 %v1156, %v1156
          %v1173 = vpack.c.b16 %v1157, %v1157
          %v1174 = vpack.c.b16 %v1158, %v1158
          %v1175 = vpack.c.b16 %v1159, %v1159
          %v1176 = vpack.c.b16 %v1160, %v1160
          %v1177 = vpack.c.b16 %v1161, %v1161
          %v1178 = vpack.c.b16 %v1162, %v1162
          %v1179 = vpack.c.b16 %v1163, %v1163
          %v1180 = vpack.c.b16 %v1164, %v1164
          %v1181 = vpack.c.b16 %v1165, %v1165
          %v1182 = vpack.c.b16 %v1166, %v1166
          %v1183 = vpack.c.b16 %v1167, %v1167
          %v1184 = vpack.c.b16 %v1168, %v1168
          %v1185 = vpack.c.b16 %v1169, %v1169
          %v1186 = vpack.c.b16 %v1170, %v1170
          %v1187 = vpack.c.b16 %v1171, %v1171
          %1204 = vst [vmem:[%s351] sm:$0xf] %v1172
          %1205 = vst [vmem:[%s351 + $0x4] sm:$0xf] %v1173
          %1206 = vst [vmem:[%s351 + $0x8] sm:$0xf] %v1174
          %1207 = vst [vmem:[%s351 + $0xc] sm:$0xf] %v1175
          %1208 = vst [vmem:[%s351 + $0x10] sm:$0xf] %v1176
          %1209 = vst [vmem:[%s351 + $0x14] sm:$0xf] %v1177
          %1210 = vst [vmem:[%s351 + $0x18] sm:$0xf] %v1178
          %1211 = vst [vmem:[%s351 + $0x1c] sm:$0xf] %v1179
          %1212 = vst [vmem:[%s351 + $0x20] sm:$0xf] %v1180
          %1213 = vst [vmem:[%s351 + $0x24] sm:$0xf] %v1181
          %1214 = vst [vmem:[%s351 + $0x28] sm:$0xf] %v1182
          %1215 = vst [vmem:[%s351 + $0x2c] sm:$0xf] %v1183
          %1216 = vst [vmem:[%s351 + $0x30] sm:$0xf] %v1184
          %1217 = vst [vmem:[%s351 + $0x34] sm:$0xf] %v1185
          %1218 = vst [vmem:[%s351 + $0x38] sm:$0xf] %v1186
          %1219 = vst [vmem:[%s351 + $0x3c] sm:$0xf] %v1187
        $region68: #{tpu_custom_call.1} parent=39 // pred_fallthru
          _
        %s1220 = sand.u32 %s180, 1
        %s1221 = scalar_lea.sflag [#allocation7], %s1220
        %s1222 = sand.u32 %s180, 1
        %s1223 = smul.addr %s1222, 64
        %s1224 = scalar_lea.vmem [#allocation13], %s1223
        // Predicated region
        $region69: #{tpu_custom_call.1} parent=39 // pred_check
          %p1225 = pneg %p190
        $region70: #{tpu_custom_call.1} parent=39 // pred_check_branch
          %1227 = sbr.rel (%p1225) target = $region72
        $region71: #{tpu_custom_call.1} parent=39 // pred_region
          %s1228 = smul.u32 16, %s35
          %s1230 = ssub.s32 1024, 1024
          %1231 = vsyncadd %s1221, %s1230
          %s1232 = smul.addr %s1228, 64
          %s1233 = scalar_lea.hbm %s6, %s1232
          %s1234 = sshll.u32 %s1224, 4
          %s1235 = int_to_ptr.vmem [resolvable:$true] %s1234
          %1240 = dma.vmem_to_hbm [thread:$0]  %s1235, 1024, %s1233, %s1221, 64, 64, 4
        $region72: #{tpu_custom_call.1} parent=39 // pred_fallthru
          _
      $region40: #{tpu_custom_call.1} parent=5 // pred_fallthru
        _
      %p1241 = scmp.le.s32.totalorder 2, %s26
      // Predicated region
      $region73: #{tpu_custom_call.1} parent=5 // pred_check
        %p1242 = pneg %p1241
      $region74: #{tpu_custom_call.1} parent=5 // pred_check_branch
        %1244 = sbr.rel (%p1242) target = $region76
      $region75: #{tpu_custom_call.1} parent=5 // pred_region
        %s1245 = ssub.s32 %s26, 2
        // Predicated region
        $region77: #{tpu_custom_call.1} parent=75 // pred_check
          %p1246 = pneg %p196
        $region78: #{tpu_custom_call.1} parent=75 // pred_check_branch
          %1248 = sbr.rel (%p1246) target = $region80
        $region79: #{tpu_custom_call.1} parent=75 // pred_region
          %s1249 = sand.u32 %s181, 1
          %s1250 = scalar_lea.sflag [#allocation7], %s1249
          %s1251 = sand.u32 %s181, 1
          %s1252 = smul.addr %s1251, 64
          %s1253 = scalar_lea.vmem [#allocation13], %s1252
          %1254 = dma.done %s1250, 1024
        $region80: #{tpu_custom_call.1} parent=75 // pred_fallthru
          _
      $region76: #{tpu_custom_call.1} parent=5 // pred_fallthru
        _
    $region6: #{tpu_custom_call.1} parent=1 // loop_footer
      %s30 = sadd.s32 1, %s26
    $region7: #{tpu_custom_call.1} parent=1 // loop_footer_branch
      %25 = sbr.rel target = $region3
    $region8: #{tpu_custom_call.1} parent=1 // loop_exit
      _
    %1255 = vsyncpa [#allocation6], 1
    %s1256 = scalar_lea.sflag [#allocation6], 1
    %1257 = vsyncpa %s1256, 1
    %1258 = vsyncpa [#allocation9], 1
    %s1259 = scalar_lea.sflag [#allocation9], 1
    %1260 = vsyncpa %s1259, 1
    %1261 = vsyncpa [#allocation12], 1
    %1262 = vsyncpa [#allocation7], 1
    %s1263 = scalar_lea.sflag [#allocation7], 1
    %1264 = vsyncpa %s1263, 1

// kernel: tpu_custom_call.1
$region0: #{tpu_custom_call.1}
  #allocation0 [shape = 'u32[]', space=smem, size = 0x4, offset = 0x4, fixed_abs, tag = 'smem constant byte address 0x4 - core index']
  #allocation1 [shape = 'u32[144,128]{1,0:T(1,128)}', space=vmem, size = 0x12000, scoped, tag = 'internal scratch']
  #allocation2 [shape = 'f32[128,128]{1,0:T(8,128)}', space=vmem, size = 0x10000, scoped, tag = 'scratch operand']
  #allocation3 [shape = 's32[1]{0}', space=sflag, size = 0x4, scoped, tag = 'scoped memory for tpu_custom_call.1']
  #allocation4 [shape = 'u8[512]{0}', space=smem, size = 0x200, scoped, tag = 'prefetched SMEM operand 0']
  %s0 = inlined_call_operand.hbm [shape: s32[8], index: 0, kind: input, shape index: {}]
  %s1 = inlined_call_operand.hbm [shape: bf16[512,512], index: 1, kind: input, shape index: {}]
  %s2 = inlined_call_operand.hbm [shape: bf16[512,128], index: 2, kind: input, shape index: {}]
  %s3 = inlined_call_operand.hbm [shape: bf16[128,128], index: 3, kind: input, shape index: {}]
  %s4 = inlined_call_operand.vmem [shape: f32[1,128], index: 4, kind: input, shape index: {}]
  %s5 = inlined_call_operand.hbm [shape: bf16[128,128], index: 5, kind: input, shape index: {}]
  %s6 = inlined_call_operand.hbm [shape: bf16[512,128], index: 6, kind: output, shape index: {}]
  %s7 = sld [smem:[#allocation0]]
  $region81: #{tpu_custom_call.1} parent=0
    _
  %s9 = ssub.s32 1, %s7
  %s10 = scalar_select 0, %s9, %s7
  %12 = dma.hbm_to_smem %s0, 16, [#allocation4], [#allocation3]
  %13 = dma.done [#allocation3], 16
  %14 = sfence
  $region1: #{tpu_custom_call.1} parent=0
    #allocation5 [shape = 'u8[131072]{0}', space=vmem, size = 0x20000, scoped, tag = 'input window, operand 1']
    #allocation6 [shape = 's32[2]{0}', space=sflag, size = 0x8, scoped, tag = 'scoped memory for tpu_custom_call.1']
    #allocation7 [shape = 's32[2]{0}', space=sflag, size = 0x8, scoped, tag = 'scoped memory for tpu_custom_call.1']
    #allocation8 [shape = 'u8[131072]{0}', space=vmem, size = 0x20000, scoped, tag = 'input window, operand 2']
    #allocation9 [shape = 's32[2]{0}', space=sflag, size = 0x8, scoped, tag = 'scoped memory for tpu_custom_call.1']
    #allocation10 [shape = 'u8[32768]{0}', space=vmem, size = 0x8000, scoped, tag = 'input window, operand 3, single buffered']
    #allocation11 [shape = 'u8[32768]{0}', space=vmem, size = 0x8000, scoped, tag = 'input window, operand 5, single buffered']
    #allocation12 [shape = 's32[1]{0}', space=sflag, size = 0x4, scoped, tag = 'scoped memory for tpu_custom_call.1']
    #allocation13 [shape = 'u8[65536]{0}', space=vmem, size = 0x10000, scoped, tag = 'output window, operand 0']
    %15 = vsyncpa [#allocation6], 0
    %s16 = scalar_lea.sflag [#allocation6], 1
    %17 = vsyncpa %s16, 0
    %18 = vsyncpa [#allocation9], 0
    %s19 = scalar_lea.sflag [#allocation9], 1
    %20 = vsyncpa %s19, 0
    %21 = vsyncpa [#allocation12], 0
    %22 = vsyncpa [#allocation7], 0
    %s23 = scalar_lea.sflag [#allocation7], 1
    %24 = vsyncpa %s23, 0
    loop: start=0, step=1, limit=10
    $region2: #{tpu_custom_call.1} parent=1 // loop_pre_header
      _
    $region3: #{tpu_custom_call.1} parent=1 // loop_header
      %s26 = sphi 0, %s30
      %p27 = scmp.ge.s32.totalorder %s26, 10
      %s33 = sphi 0, %s45
      %s34 = sphi 0, %s41
      %s35 = sphi 0, %s33
      %s36 = sphi 0, %s34
      %s37 = sphi 0, %s35
      %s38 = sphi 0, %s36
      %s56 = sphi 0, %s58
      %s59 = sphi 0, %s56
      %s60 = sphi 0, %s59
      %s76 = sphi 0, %s60
      %s88 = sphi 0, %s90
      %s91 = sphi 0, %s88
      %s92 = sphi 0, %s91
      %s108 = sphi 0, %s92
      %s112 = sphi 0, %s112
      %s114 = sphi 0, %s112
      %s115 = sphi 0, %s114
      %s129 = sphi 0, %s115
      %s133 = sphi 0, %s133
      %s135 = sphi 0, %s133
      %s136 = sphi 0, %s135
      %s150 = sphi 0, %s136
      %s154 = sphi 0, %s154
      %s156 = sphi 0, %s154
      %s157 = sphi 0, %s156
      %s171 = sphi 0, %s157
      %s177 = sphi 0, %s179
      %s180 = sphi 0, %s177
      %s181 = sphi 0, %s180
      %s197 = sphi 0, %s181
    $region4: #{tpu_custom_call.1} parent=1 // loop_header_branch
      %29 = sbr.rel (%p27) target = $region8
    $region5: #{tpu_custom_call.1} parent=1 // loop_body
      %s31 = ssub.s32 %s26, 1
      %s32 = ssub.s32 %s26, 2
      %s39 = sadd.s32 1, %s34
      %p40 = scmp.ge.s32.totalorder %s39, 2
      %s41 = scalar_select %p40, 0, %s39
      %s42 = sadd.s32 1, %s33
      %s43 = scalar_select %p40, %s42, %s33
      %p44 = scmp.ge.s32.totalorder %s43, 4
      %s45 = scalar_select %p44, 0, %s43
      %s46 = smul.u32 %s33, 2
      %s47 = sadd.s32 %s46, %s34
      %s48 = sld [smem:[#allocation4 + %s47]]
      %s49 = smul.u32 %s45, 2
      %s50 = sadd.s32 %s49, %s41
      %s51 = sld [smem:[#allocation4 + %s50]]
      %s52 = ssub.s32 %s33, %s45
      %s53 = ssub.s32 %s48, %s51
      %s54 = sor.u32 %s52, %s53
      %p55 = scmp.eq.s32.totalorder %s54, 0
      %s57 = sadd.s32 %s56, 1
      %s58 = scalar_select %p55, %s56, %s57
      %p61 = pneg %p55
      %p62 = scmp.eq.s32.totalorder %s26, 7
      %p63 = por %p61, %p62
      %p64 = scmp.ne.s32.totalorder %s56, %s59
      %p65 = scmp.eq.s32.totalorder %s26, 0
      %p66 = por %p64, %p65
      %p67 = scmp.ne.s32.totalorder %s56, %s59
      %p68 = scmp.eq.s32.totalorder %s31, 7
      %p69 = por %p67, %p68
      %p70 = scmp.ne.s32.totalorder %s59, %s60
      %p71 = scmp.eq.s32.totalorder %s31, 0
      %p72 = por %p70, %p71
      %p73 = scmp.ne.s32.totalorder %s59, %s60
      %p74 = scmp.eq.s32.totalorder %s32, 7
      %p75 = por %p73, %p74
      %p77 = scmp.ne.s32.totalorder %s60, %s76
      %p78 = scmp.eq.s32.totalorder %s32, 0
      %p79 = por %p77, %p78
      %s80 = smul.u32 %s33, 2
      %s81 = sadd.s32 %s80, %s34
      %s82 = sld [smem:[#allocation4 + %s81]]
      %s83 = smul.u32 %s45, 2
      %s84 = sadd.s32 %s83, %s41
      %s85 = sld [smem:[#allocation4 + %s84]]
      %s86 = ssub.s32 %s82, %s85
      %p87 = scmp.eq.s32.totalorder %s86, 0
      %s89 = sadd.s32 %s88, 1
      %s90 = scalar_select %p87, %s88, %s89
      %p93 = pneg %p87
      %p94 = scmp.eq.s32.totalorder %s26, 7
      %p95 = por %p93, %p94
      %p96 = scmp.ne.s32.totalorder %s88, %s91
      %p97 = scmp.eq.s32.totalorder %s26, 0
      %p98 = por %p96, %p97
      %p99 = scmp.ne.s32.totalorder %s88, %s91
      %p100 = scmp.eq.s32.totalorder %s31, 7
      %p101 = por %p99, %p100
      %p102 = scmp.ne.s32.totalorder %s91, %s92
      %p103 = scmp.eq.s32.totalorder %s31, 0
      %p104 = por %p102, %p103
      %p105 = scmp.ne.s32.totalorder %s91, %s92
      %p106 = scmp.eq.s32.totalorder %s32, 7
      %p107 = por %p105, %p106
      %p109 = scmp.ne.s32.totalorder %s92, %s108
      %p110 = scmp.eq.s32.totalorder %s32, 0
      %p111 = por %p109, %p110
      %s113 = sadd.s32 %s112, 1
      %p116 = scmp.eq.s32.totalorder %s26, 7
      %p117 = scmp.ne.s32.totalorder %s112, %s114
      %p118 = scmp.eq.s32.totalorder %s26, 0
      %p119 = por %p117, %p118
      %p120 = scmp.ne.s32.totalorder %s112, %s114
      %p121 = scmp.eq.s32.totalorder %s31, 7
      %p122 = por %p120, %p121
      %p123 = scmp.ne.s32.totalorder %s114, %s115
      %p124 = scmp.eq.s32.totalorder %s31, 0
      %p125 = por %p123, %p124
      %p126 = scmp.ne.s32.totalorder %s114, %s115
      %p127 = scmp.eq.s32.totalorder %s32, 7
      %p128 = por %p126, %p127
      %p130 = scmp.ne.s32.totalorder %s115, %s129
      %p131 = scmp.eq.s32.totalorder %s32, 0
      %p132 = por %p130, %p131
      %s134 = sadd.s32 %s133, 1
      %p137 = scmp.eq.s32.totalorder %s26, 7
      %p138 = scmp.ne.s32.totalorder %s133, %s135
      %p139 = scmp.eq.s32.totalorder %s26, 0
      %p140 = por %p138, %p139
      %p141 = scmp.ne.s32.totalorder %s133, %s135
      %p142 = scmp.eq.s32.totalorder %s31, 7
      %p143 = por %p141, %p142
      %p144 = scmp.ne.s32.totalorder %s135, %s136
      %p145 = scmp.eq.s32.totalorder %s31, 0
      %p146 = por %p144, %p145
      %p147 = scmp.ne.s32.totalorder %s135, %s136
      %p148 = scmp.eq.s32.totalorder %s32, 7
      %p149 = por %p147, %p148
      %p151 = scmp.ne.s32.totalorder %s136, %s150
      %p152 = scmp.eq.s32.totalorder %s32, 0
      %p153 = por %p151, %p152
      %s155 = sadd.s32 %s154, 1
      %p158 = scmp.eq.s32.totalorder %s26, 7
      %p159 = scmp.ne.s32.totalorder %s154, %s156
      %p160 = scmp.eq.s32.totalorder %s26, 0
      %p161 = por %p159, %p160
      %p162 = scmp.ne.s32.totalorder %s154, %s156
      %p163 = scmp.eq.s32.totalorder %s31, 7
      %p164 = por %p162, %p163
      %p165 = scmp.ne.s32.totalorder %s156, %s157
      %p166 = scmp.eq.s32.totalorder %s31, 0
      %p167 = por %p165, %p166
      %p168 = scmp.ne.s32.totalorder %s156, %s157
      %p169 = scmp.eq.s32.totalorder %s32, 7
      %p170 = por %p168, %p169
      %p172 = scmp.ne.s32.totalorder %s157, %s171
      %p173 = scmp.eq.s32.totalorder %s32, 0
      %p174 = por %p172, %p173
      %s175 = ssub.s32 %s33, %s45
      %p176 = scmp.eq.s32.totalorder %s175, 0
      %s178 = sadd.s32 %s177, 1
      %s179 = scalar_select %p176, %s177, %s178
      %p182 = pneg %p176
      %p183 = scmp.eq.s32.totalorder %s26, 7
      %p184 = por %p182, %p183
      %p185 = scmp.ne.s32.totalorder %s177, %s180
      %p186 = scmp.eq.s32.totalorder %s26, 0
      %p187 = por %p185, %p186
      %p188 = scmp.ne.s32.totalorder %s177, %s180
      %p189 = scmp.eq.s32.totalorder %s31, 7
      %p190 = por %p188, %p189
      %p191 = scmp.ne.s32.totalorder %s180, %s181
      %p192 = scmp.eq.s32.totalorder %s31, 0
      %p193 = por %p191, %p192
      %p194 = scmp.ne.s32.totalorder %s180, %s181
      %p195 = scmp.eq.s32.totalorder %s32, 7
      %p196 = por %p194, %p195
      %p198 = scmp.ne.s32.totalorder %s181, %s197
      %p199 = scmp.eq.s32.totalorder %s32, 0
      %p200 = por %p198, %p199
      %p201 = scmp.le.s32.totalorder 1, %s26
      %p202 = scmp.lt.s32.totalorder %s26, 9
      %p203 = pnand %p201, %p202
      %p204 = pneg %p203
      // Predicated region
      $region9: #{tpu_custom_call.1} parent=5 // pred_check
        _
      $region10: #{tpu_custom_call.1} parent=5 // pred_check_branch
        %206 = sbr.rel (%p203) target = $region12
      $region11: #{tpu_custom_call.1} parent=5 // pred_region
        %s207 = ssub.s32 %s26, 1
        // Predicated region
        $region13: #{tpu_custom_call.1} parent=11 // pred_check
          %p208 = pneg %p125
        $region14: #{tpu_custom_call.1} parent=11 // pred_check_branch
          %210 = sbr.rel (%p208) target = $region16
        $region15: #{tpu_custom_call.1} parent=11 // pred_region
          %s212 = ssub.s32 1024, 1024
          %213 = vsyncadd [#allocation9], %s212
          %s214 = sshll.u32 [#allocation10], 4
          %s215 = int_to_ptr.vmem [resolvable:$true] %s214
          %220 = dma.hbm_to_vmem [thread:$0]  %s3, 1024, %s215, [#allocation9], 64, 64, 4
        $region16: #{tpu_custom_call.1} parent=11 // pred_fallthru
          _
        // Predicated region
        $region17: #{tpu_custom_call.1} parent=11 // pred_check
          %p221 = pneg %p146
        $region18: #{tpu_custom_call.1} parent=11 // pred_check_branch
          %223 = sbr.rel (%p221) target = $region20
        $region19: #{tpu_custom_call.1} parent=11 // pred_region
          _
        $region20: #{tpu_custom_call.1} parent=11 // pred_fallthru
          _
        // Predicated region
        $region21: #{tpu_custom_call.1} parent=11 // pred_check
          %p224 = pneg %p167
        $region22: #{tpu_custom_call.1} parent=11 // pred_check_branch
          %226 = sbr.rel (%p224) target = $region24
        $region23: #{tpu_custom_call.1} parent=11 // pred_region
          %s228 = ssub.s32 1024, 1024
          %229 = vsyncadd [#allocation12], %s228
          %s230 = sshll.u32 [#allocation11], 4
          %s231 = int_to_ptr.vmem [resolvable:$true] %s230
          %236 = dma.hbm_to_vmem [thread:$0]  %s5, 1024, %s231, [#allocation12], 64, 64, 4
        $region24: #{tpu_custom_call.1} parent=11 // pred_fallthru
          _
      $region12: #{tpu_custom_call.1} parent=5 // pred_fallthru
        _
      %p237 = scmp.lt.s32.totalorder %s26, 8
      // Predicated region
      $region25: #{tpu_custom_call.1} parent=5 // pred_check
        %p238 = pneg %p237
      $region26: #{tpu_custom_call.1} parent=5 // pred_check_branch
        %240 = sbr.rel (%p238) target = $region28
      $region27: #{tpu_custom_call.1} parent=5 // pred_region
        // Predicated region
        $region29: #{tpu_custom_call.1} parent=27 // pred_check
          %p241 = pneg %p66
        $region30: #{tpu_custom_call.1} parent=27 // pred_check_branch
          %243 = sbr.rel (%p241) target = $region32
        $region31: #{tpu_custom_call.1} parent=27 // pred_region
          %s244 = sand.u32 %s56, 1
          %s245 = scalar_lea.sflag [#allocation6], %s244
          %s246 = sand.u32 %s56, 1
          %s247 = smul.addr %s246, 128
          %s248 = scalar_lea.vmem [#allocation5], %s247
          %s249 = smul.u32 %s33, 2
          %s250 = sadd.s32 %s249, %s34
          %s251 = sld [smem:[#allocation4 + %s250]]
          %s252 = smul.u32 16, %s33
          %s253 = smul.u32 2, %s251
          %s255 = ssub.s32 2048, 2048
          %256 = vsyncadd %s245, %s255
          %s257 = smul.addr %s252, 4
          %s258 = sadd.s32 %s253, %s257
          %s259 = smul.addr %s258, 64
          %s260 = scalar_lea.hbm %s1, %s259
          %s261 = sshll.u32 %s248, 4
          %s262 = int_to_ptr.vmem [resolvable:$true] %s261
          %267 = dma.hbm_to_vmem [thread:$0]  %s260, 2048, %s262, %s245, 256, 128, 8
        $region32: #{tpu_custom_call.1} parent=27 // pred_fallthru
          _
        // Predicated region
        $region33: #{tpu_custom_call.1} parent=27 // pred_check
          %p268 = pneg %p98
        $region34: #{tpu_custom_call.1} parent=27 // pred_check_branch
          %270 = sbr.rel (%p268) target = $region36
        $region35: #{tpu_custom_call.1} parent=27 // pred_region
          %s271 = sand.u32 %s26, 1
          %s272 = scalar_lea.sflag [#allocation9], %s271
          %s273 = sand.u32 %s88, 1
          %s274 = smul.addr %s273, 128
          %s275 = scalar_lea.vmem [#allocation8], %s274
          %s276 = smul.u32 %s33, 2
          %s277 = sadd.s32 %s276, %s34
          %s278 = sld [smem:[#allocation4 + %s277]]
          %s279 = smul.u32 32, %s278
          %s281 = ssub.s32 2048, 2048
          %282 = vsyncadd %s272, %s281
          %s283 = smul.addr %s279, 64
          %s284 = scalar_lea.hbm %s2, %s283
          %s285 = sshll.u32 %s275, 4
          %s286 = int_to_ptr.vmem [resolvable:$true] %s285
          %291 = dma.hbm_to_vmem [thread:$0]  %s284, 2048, %s286, %s272, 64, 64, 4
        $region36: #{tpu_custom_call.1} parent=27 // pred_fallthru
          _
      $region28: #{tpu_custom_call.1} parent=5 // pred_fallthru
        _
      %p292 = scmp.le.s32.totalorder 1, %s26
      %p293 = scmp.lt.s32.totalorder %s26, 9
      %p294 = pnand %p292, %p293
      %p295 = pneg %p294
      // Predicated region
      $region37: #{tpu_custom_call.1} parent=5 // pred_check
        _
      $region38: #{tpu_custom_call.1} parent=5 // pred_check_branch
        %297 = sbr.rel (%p294) target = $region40
      $region39: #{tpu_custom_call.1} parent=5 // pred_region
        %s298 = ssub.s32 %s26, 1
        %s299 = sand.u32 %s59, 1
        %s300 = scalar_lea.sflag [#allocation6], %s299
        %s301 = sand.u32 %s59, 1
        %s302 = smul.addr %s301, 128
        %s303 = scalar_lea.vmem [#allocation5], %s302
        // Predicated region
        $region41: #{tpu_custom_call.1} parent=39 // pred_check
          %p304 = pneg %p72
        $region42: #{tpu_custom_call.1} parent=39 // pred_check_branch
          %306 = sbr.rel (%p304) target = $region44
        $region43: #{tpu_custom_call.1} parent=39 // pred_region
          %307 = dma.done %s300, 2048
        $region44: #{tpu_custom_call.1} parent=39 // pred_fallthru
          _
        %s308 = sand.u32 %s31, 1
        %s309 = scalar_lea.sflag [#allocation9], %s308
        %s310 = sand.u32 %s91, 1
        %s311 = smul.addr %s310, 128
        %s312 = scalar_lea.vmem [#allocation8], %s311
        // Predicated region
        $region45: #{tpu_custom_call.1} parent=39 // pred_check
          %p313 = pneg %p104
        $region46: #{tpu_custom_call.1} parent=39 // pred_check_branch
          %315 = sbr.rel (%p313) target = $region48
        $region47: #{tpu_custom_call.1} parent=39 // pred_region
          %316 = dma.done %s309, 2048
        $region48: #{tpu_custom_call.1} parent=39 // pred_fallthru
          _
        // Predicated region
        $region49: #{tpu_custom_call.1} parent=39 // pred_check
          %p317 = pneg %p125
        $region50: #{tpu_custom_call.1} parent=39 // pred_check_branch
          %319 = sbr.rel (%p317) target = $region52
        $region51: #{tpu_custom_call.1} parent=39 // pred_region
          %320 = dma.done [#allocation9], 1024
        $region52: #{tpu_custom_call.1} parent=39 // pred_fallthru
          _
        // Predicated region
        $region53: #{tpu_custom_call.1} parent=39 // pred_check
          %p321 = pneg %p167
        $region54: #{tpu_custom_call.1} parent=39 // pred_check_branch
          %323 = sbr.rel (%p321) target = $region56
        $region55: #{tpu_custom_call.1} parent=39 // pred_region
          %324 = dma.done [#allocation12], 1024
        $region56: #{tpu_custom_call.1} parent=39 // pred_fallthru
          _
        %s325 = sand.u32 %s59, 1
        %s326 = scalar_lea.sflag [#allocation6], %s325
        %s327 = sand.u32 %s59, 1
        %s328 = smul.addr %s327, 128
        %s329 = scalar_lea.vmem [#allocation5], %s328
        %p330 = pneg %p72
        %p331 = pneg %p69
        %s332 = sand.u32 %s31, 1
        %s333 = scalar_lea.sflag [#allocation9], %s332
        %s334 = sand.u32 %s91, 1
        %s335 = smul.addr %s334, 128
        %s336 = scalar_lea.vmem [#allocation8], %s335
        %p337 = pneg %p104
        %p338 = pneg %p101
        %p339 = pneg %p125
        %p340 = pneg %p122
        %p341 = pneg %p146
        %p342 = pneg %p143
        %p343 = pneg %p167
        %p344 = pneg %p164
        %p345 = pneg %p193
        %p346 = pneg %p190
        %s347 = sand.u32 %s180, 1
        %s348 = scalar_lea.sflag [#allocation7], %s347
        %s349 = sand.u32 %s180, 1
        %s350 = smul.addr %s349, 64
        %s351 = scalar_lea.vmem [#allocation13], %s350
        %s352 = smul.u32 %s35, 2
        %s353 = sadd.s32 %s352, %s36
        %s354 = sld [smem:[#allocation4 + %s353]]
        %s355 = smul.u32 16, %s35
        %s356 = smul.u32 2, %s354
        %s357 = smul.u32 %s35, 2
        %s358 = sadd.s32 %s357, %s36
        %s359 = sld [smem:[#allocation4 + %s358]]
        %s360 = smul.u32 32, %s359
        %s361 = smul.u32 16, %s35
        %p363 = scmp.eq.s32.totalorder %s36, 0
        // Predicated region
        $region57: #{tpu_custom_call.1} parent=39 // pred_check
          %p364 = pneg %p363
        $region58: #{tpu_custom_call.1} parent=39 // pred_check_branch
          %366 = sbr.rel (%p364) target = $region60
        $region59: #{tpu_custom_call.1} parent=39 // pred_region
          %367 = vst [vmem:[#allocation2] sm:$0xff] 0.0
          %368 = vst [vmem:[#allocation2 + $0x8] sm:$0xff] 0.0
          %369 = vst [vmem:[#allocation2 + $0x10] sm:$0xff] 0.0
          %370 = vst [vmem:[#allocation2 + $0x18] sm:$0xff] 0.0
          %371 = vst [vmem:[#allocation2 + $0x20] sm:$0xff] 0.0
          %372 = vst [vmem:[#allocation2 + $0x28] sm:$0xff] 0.0
          %373 = vst [vmem:[#allocation2 + $0x30] sm:$0xff] 0.0
          %374 = vst [vmem:[#allocation2 + $0x38] sm:$0xff] 0.0
          %375 = vst [vmem:[#allocation2 + $0x40] sm:$0xff] 0.0
          %376 = vst [vmem:[#allocation2 + $0x48] sm:$0xff] 0.0
          %377 = vst [vmem:[#allocation2 + $0x50] sm:$0xff] 0.0
          %378 = vst [vmem:[#allocation2 + $0x58] sm:$0xff] 0.0
          %379 = vst [vmem:[#allocation2 + $0x60] sm:$0xff] 0.0
          %380 = vst [vmem:[#allocation2 + $0x68] sm:$0xff] 0.0
          %381 = vst [vmem:[#allocation2 + $0x70] sm:$0xff] 0.0
          %382 = vst [vmem:[#allocation2 + $0x78] sm:$0xff] 0.0
        $region60: #{tpu_custom_call.1} parent=39 // pred_fallthru
          _
        %s383 = smul.u32 %s35, 2
        %s384 = sadd.s32 %s383, %s36
        %s385 = sld [smem:[#allocation4 + %s384]]
        %p386 = scmp.eq.s32.totalorder %s385, %s36
        // Predicated region
        $region61: #{tpu_custom_call.1} parent=39 // pred_check
          %p387 = pneg %p386
        $region62: #{tpu_custom_call.1} parent=39 // pred_check_branch
          %389 = sbr.rel (%p387) target = $region64
        $region63: #{tpu_custom_call.1} parent=39 // pred_region
          %v390 = vld [vmem:[#allocation2] sm:$0xff]
          %v391 = vld [vmem:[#allocation2 + $0x8] sm:$0xff]
          %v392 = vld [vmem:[#allocation2 + $0x10] sm:$0xff]
          %v393 = vld [vmem:[#allocation2 + $0x18] sm:$0xff]
          %v394 = vld [vmem:[#allocation2 + $0x20] sm:$0xff]
          %v395 = vld [vmem:[#allocation2 + $0x28] sm:$0xff]
          %v396 = vld [vmem:[#allocation2 + $0x30] sm:$0xff]
          %v397 = vld [vmem:[#allocation2 + $0x38] sm:$0xff]
          %v398 = vld [vmem:[#allocation2 + $0x40] sm:$0xff]
          %v399 = vld [vmem:[#allocation2 + $0x48] sm:$0xff]
          %v400 = vld [vmem:[#allocation2 + $0x50] sm:$0xff]
          %v401 = vld [vmem:[#allocation2 + $0x58] sm:$0xff]
          %v402 = vld [vmem:[#allocation2 + $0x60] sm:$0xff]
          %v403 = vld [vmem:[#allocation2 + $0x68] sm:$0xff]
          %v404 = vld [vmem:[#allocation2 + $0x70] sm:$0xff]
          %v405 = vld [vmem:[#allocation2 + $0x78] sm:$0xff]
          %v406 = vld [vmem:[%s303] sm:$0xff]
          %v407 = vld [vmem:[%s303 + $0x8] sm:$0xff]
          %v408 = vld [vmem:[%s303 + $0x10] sm:$0xff]
          %v409 = vld [vmem:[%s303 + $0x18] sm:$0xff]
          %v410 = vld [vmem:[%s303 + $0x20] sm:$0xff]
          %v411 = vld [vmem:[%s303 + $0x28] sm:$0xff]
          %v412 = vld [vmem:[%s303 + $0x30] sm:$0xff]
          %v413 = vld [vmem:[%s303 + $0x38] sm:$0xff]
          %v414 = vld [vmem:[%s303 + $0x40] sm:$0xff]
          %v415 = vld [vmem:[%s303 + $0x48] sm:$0xff]
          %v416 = vld [vmem:[%s303 + $0x50] sm:$0xff]
          %v417 = vld [vmem:[%s303 + $0x58] sm:$0xff]
          %v418 = vld [vmem:[%s303 + $0x60] sm:$0xff]
          %v419 = vld [vmem:[%s303 + $0x68] sm:$0xff]
          %v420 = vld [vmem:[%s303 + $0x70] sm:$0xff]
          %v421 = vld [vmem:[%s303 + $0x78] sm:$0xff]
          %v422 = vld [vmem:[%s312] sm:$0xf]
          %v423 = vld [vmem:[%s312 + $0x4] sm:$0xf]
          %v424 = vld [vmem:[%s312 + $0x8] sm:$0xf]
          %v425 = vld [vmem:[%s312 + $0xc] sm:$0xf]
          %v426 = vld [vmem:[%s312 + $0x10] sm:$0xf]
          %v427 = vld [vmem:[%s312 + $0x14] sm:$0xf]
          %v428 = vld [vmem:[%s312 + $0x18] sm:$0xf]
          %v429 = vld [vmem:[%s312 + $0x1c] sm:$0xf]
          %v430 = vld [vmem:[%s312 + $0x20] sm:$0xf]
          %v431 = vld [vmem:[%s312 + $0x24] sm:$0xf]
          %v432 = vld [vmem:[%s312 + $0x28] sm:$0xf]
          %v433 = vld [vmem:[%s312 + $0x2c] sm:$0xf]
          %v434 = vld [vmem:[%s312 + $0x30] sm:$0xf]
          %v435 = vld [vmem:[%s312 + $0x34] sm:$0xf]
          %v436 = vld [vmem:[%s312 + $0x38] sm:$0xf]
          %v437 = vld [vmem:[%s312 + $0x3c] sm:$0xf]
          %v438 = vld [vmem:[%s312 + $0x40] sm:$0xf]
          %v439 = vld [vmem:[%s312 + $0x44] sm:$0xf]
          %v440 = vld [vmem:[%s312 + $0x48] sm:$0xf]
          %v441 = vld [vmem:[%s312 + $0x4c] sm:$0xf]
          %v442 = vld [vmem:[%s312 + $0x50] sm:$0xf]
          %v443 = vld [vmem:[%s312 + $0x54] sm:$0xf]
          %v444 = vld [vmem:[%s312 + $0x58] sm:$0xf]
          %v445 = vld [vmem:[%s312 + $0x5c] sm:$0xf]
          %v446 = vld [vmem:[%s312 + $0x60] sm:$0xf]
          %v447 = vld [vmem:[%s312 + $0x64] sm:$0xf]
          %v448 = vld [vmem:[%s312 + $0x68] sm:$0xf]
          %v449 = vld [vmem:[%s312 + $0x6c] sm:$0xf]
          %v450 = vld [vmem:[%s312 + $0x70] sm:$0xf]
          %v451 = vld [vmem:[%s312 + $0x74] sm:$0xf]
          %v452 = vld [vmem:[%s312 + $0x78] sm:$0xf]
          %v453 = vld [vmem:[%s312 + $0x7c] sm:$0xf]
          %v470 = vunpack.c.l.b16 %v406
          %v471 = vunpack.c.h.b16 %v406
          %v472 = vunpack.c.l.b16 %v407
          %v473 = vunpack.c.h.b16 %v407
          %v474 = vunpack.c.l.b16 %v408
          %v475 = vunpack.c.h.b16 %v408
          %v476 = vunpack.c.l.b16 %v409
          %v477 = vunpack.c.h.b16 %v409
          %v478 = vunpack.c.l.b16 %v410
          %v479 = vunpack.c.h.b16 %v410
          %v480 = vunpack.c.l.b16 %v411
          %v481 = vunpack.c.h.b16 %v411
          %v482 = vunpack.c.l.b16 %v412
          %v483 = vunpack.c.h.b16 %v412
          %v484 = vunpack.c.l.b16 %v413
          %v485 = vunpack.c.h.b16 %v413
          %v486 = vunpack.c.l.b16 %v414
          %v487 = vunpack.c.h.b16 %v414
          %v488 = vunpack.c.l.b16 %v415
          %v489 = vunpack.c.h.b16 %v415
          %v490 = vunpack.c.l.b16 %v416
          %v491 = vunpack.c.h.b16 %v416
          %v492 = vunpack.c.l.b16 %v417
          %v493 = vunpack.c.h.b16 %v417
          %v494 = vunpack.c.l.b16 %v418
          %v495 = vunpack.c.h.b16 %v418
          %v496 = vunpack.c.l.b16 %v419
          %v497 = vunpack.c.h.b16 %v419
          %v498 = vunpack.c.l.b16 %v420
          %v499 = vunpack.c.h.b16 %v420
          %v500 = vunpack.c.l.b16 %v421
          %v501 = vunpack.c.h.b16 %v421
          %v502 = vpack.c.b16 %v472, %v470
          %v503 = vpack.c.b16 %v473, %v471
          %v504 = vpack.c.b16 %v476, %v474
          %v505 = vpack.c.b16 %v477, %v475
          %v506 = vpack.c.b16 %v480, %v478
          %v507 = vpack.c.b16 %v481, %v479
          %v508 = vpack.c.b16 %v484, %v482
          %v509 = vpack.c.b16 %v485, %v483
          %v510 = vpack.c.b16 %v488, %v486
          %v511 = vpack.c.b16 %v489, %v487
          %v512 = vpack.c.b16 %v492, %v490
          %v513 = vpack.c.b16 %v493, %v491
          %v514 = vpack.c.b16 %v496, %v494
          %v515 = vpack.c.b16 %v497, %v495
          %v516 = vpack.c.b16 %v500, %v498
          %v517 = vpack.c.b16 %v501, %v499
          %v566 = vunpack.c.l.b16 %v422
          %v567 = vunpack.c.l.b16 %v423
          %v568 = vunpack.c.l.b16 %v424
          %v569 = vunpack.c.l.b16 %v425
          %v570 = vunpack.c.l.b16 %v426
          %v571 = vunpack.c.l.b16 %v427
          %v572 = vunpack.c.l.b16 %v428
          %v573 = vunpack.c.l.b16 %v429
          %v574 = vunpack.c.l.b16 %v430
          %v575 = vunpack.c.l.b16 %v431
          %v576 = vunpack.c.l.b16 %v432
          %v577 = vunpack.c.l.b16 %v433
          %v578 = vunpack.c.l.b16 %v434
          %v579 = vunpack.c.l.b16 %v435
          %v580 = vunpack.c.l.b16 %v436
          %v581 = vunpack.c.l.b16 %v437
          %v582 = vunpack.c.l.b16 %v438
          %v583 = vunpack.c.l.b16 %v439
          %v584 = vunpack.c.l.b16 %v440
          %v585 = vunpack.c.l.b16 %v441
          %v586 = vunpack.c.l.b16 %v442
          %v587 = vunpack.c.l.b16 %v443
          %v588 = vunpack.c.l.b16 %v444
          %v589 = vunpack.c.l.b16 %v445
          %v590 = vunpack.c.l.b16 %v446
          %v591 = vunpack.c.l.b16 %v447
          %v592 = vunpack.c.l.b16 %v448
          %v593 = vunpack.c.l.b16 %v449
          %v594 = vunpack.c.l.b16 %v450
          %v595 = vunpack.c.l.b16 %v451
          %v596 = vunpack.c.l.b16 %v452
          %v597 = vunpack.c.l.b16 %v453
          %v598 = vpack.c.b16 %v567, %v566
          %v599 = vpack.c.b16 %v569, %v568
          %v600 = vpack.c.b16 %v571, %v570
          %v601 = vpack.c.b16 %v573, %v572
          %v602 = vpack.c.b16 %v575, %v574
          %v603 = vpack.c.b16 %v577, %v576
          %v604 = vpack.c.b16 %v579, %v578
          %v605 = vpack.c.b16 %v581, %v580
          %v606 = vpack.c.b16 %v583, %v582
          %v607 = vpack.c.b16 %v585, %v584
          %v608 = vpack.c.b16 %v587, %v586
          %v609 = vpack.c.b16 %v589, %v588
          %v610 = vpack.c.b16 %v591, %v590
          %v611 = vpack.c.b16 %v593, %v592
          %v612 = vpack.c.b16 %v595, %v594
          %v613 = vpack.c.b16 %v597, %v596
          %630 = vmatprep.subr.bf16.mxu0 0
          %631 = vmatpush1.bf16.msra.mxu0 %v598
          %632 = vmatprep.subr.bf16.mxu0 0
          %633 = vmatpush1.bf16.msra.mxu0 %v599
          %634 = vmatprep.subr.bf16.mxu0 0
          %635 = vmatpush1.bf16.msra.mxu0 %v600
          %636 = vmatprep.subr.bf16.mxu0 0
          %637 = vmatpush1.bf16.msra.mxu0 %v601
          %638 = vmatprep.subr.bf16.mxu0 0
          %639 = vmatpush1.bf16.msra.mxu0 %v602
          %640 = vmatprep.subr.bf16.mxu0 0
          %641 = vmatpush1.bf16.msra.mxu0 %v603
          %642 = vmatprep.subr.bf16.mxu0 0
          %643 = vmatpush1.bf16.msra.mxu0 %v604
          %644 = vmatprep.subr.bf16.mxu0 0
          %645 = vmatpush1.bf16.msra.mxu0 %v605
          %646 = vmatprep.subr.bf16.mxu0 0
          %647 = vmatpush1.bf16.msra.mxu0 %v606
          %648 = vmatprep.subr.bf16.mxu0 0
          %649 = vmatpush1.bf16.msra.mxu0 %v607
          %650 = vmatprep.subr.bf16.mxu0 0
          %651 = vmatpush1.bf16.msra.mxu0 %v608
          %652 = vmatprep.subr.bf16.mxu0 0
          %653 = vmatpush1.bf16.msra.mxu0 %v609
          %654 = vmatprep.subr.bf16.mxu0 0
          %655 = vmatpush1.bf16.msra.mxu0 %v610
          %656 = vmatprep.subr.bf16.mxu0 0
          %657 = vmatpush1.bf16.msra.mxu0 %v611
          %658 = vmatprep.subr.bf16.mxu0 0
          %659 = vmatpush1.bf16.msra.mxu0 %v612
          %660 = vmatprep.subr.bf16.mxu0 0
          %661 = vmatpush1.bf16.msra.mxu0 %v613
          %662 = vmatprep.mubr.bf16.mxu0 %v503
          %663 = vmatmul.mubr.bf16.gmra.mrb[0].mxu0 %v502
          %v664 = vpop.f32.mrb[0].mxu0
          %v665 = vadd.f32 0.0, %v664
          %v666 = vpop.f32.mrb[0].mxu0
          %v667 = vpop.f32.mrb[0].mxu0
          %v668 = vadd.f32 0.0, %v667
          %v669 = vpop.f32.mrb[0].mxu0
          %670 = vmatprep.mubr.bf16.mxu0 %v505
          %671 = vmatmul.mubr.bf16.gmra.mrb[0].mxu0 %v504
          %v672 = vpop.f32.mrb[0].mxu0
          %v673 = vadd.f32 0.0, %v672
          %v674 = vpop.f32.mrb[0].mxu0
          %v675 = vpop.f32.mrb[0].mxu0
          %v676 = vadd.f32 0.0, %v675
          %v677 = vpop.f32.mrb[0].mxu0
          %678 = vmatprep.mubr.bf16.mxu0 %v507
          %679 = vmatmul.mubr.bf16.gmra.mrb[0].mxu0 %v506
          %v680 = vpop.f32.mrb[0].mxu0
          %v681 = vadd.f32 0.0, %v680
          %v682 = vpop.f32.mrb[0].mxu0
          %v683 = vpop.f32.mrb[0].mxu0
          %v684 = vadd.f32 0.0, %v683
          %v685 = vpop.f32.mrb[0].mxu0
          %686 = vmatprep.mubr.bf16.mxu0 %v509
          %687 = vmatmul.mubr.bf16.gmra.mrb[0].mxu0 %v508
          %v688 = vpop.f32.mrb[0].mxu0
          %v689 = vadd.f32 0.0, %v688
          %v690 = vpop.f32.mrb[0].mxu0
          %v691 = vpop.f32.mrb[0].mxu0
          %v692 = vadd.f32 0.0, %v691
          %v693 = vpop.f32.mrb[0].mxu0
          %694 = vmatprep.mubr.bf16.mxu0 %v511
          %695 = vmatmul.mubr.bf16.gmra.mrb[0].mxu0 %v510
          %v696 = vpop.f32.mrb[0].mxu0
          %v697 = vadd.f32 0.0, %v696
          %v698 = vpop.f32.mrb[0].mxu0
          %v699 = vpop.f32.mrb[0].mxu0
          %v700 = vadd.f32 0.0, %v699
          %v701 = vpop.f32.mrb[0].mxu0
          %702 = vmatprep.mubr.bf16.mxu0 %v513
          %703 = vmatmul.mubr.bf16.gmra.mrb[0].mxu0 %v512
          %v704 = vpop.f32.mrb[0].mxu0
          %v705 = vadd.f32 0.0, %v704
          %v706 = vpop.f32.mrb[0].mxu0
          %v707 = vpop.f32.mrb[0].mxu0
          %v708 = vadd.f32 0.0, %v707
          %v709 = vpop.f32.mrb[0].mxu0
          %710 = vmatprep.mubr.bf16.mxu0 %v515
          %711 = vmatmul.mubr.bf16.gmra.mrb[0].mxu0 %v514
          %v712 = vpop.f32.mrb[0].mxu0
          %v713 = vadd.f32 0.0, %v712
          %v714 = vpop.f32.mrb[0].mxu0
          %v715 = vpop.f32.mrb[0].mxu0
          %v716 = vadd.f32 0.0, %v715
          %v717 = vpop.f32.mrb[0].mxu0
          %718 = vmatprep.mubr.bf16.mxu0 %v517
          %719 = vmatmul.mubr.bf16.gmra.mrb[0].mxu0 %v516
          %v720 = vpop.f32.mrb[0].mxu0
          %v721 = vadd.f32 0.0, %v720
          %v722 = vpop.f32.mrb[0].mxu0
          %v723 = vpop.f32.mrb[0].mxu0
          %v724 = vadd.f32 0.0, %v723
          %v725 = vpop.f32.mrb[0].mxu0
          %726 = vdwg.mxu0
          %v727 = vadd.f32 %v390, %v665
          %v728 = vadd.f32 %v391, %v668
          %v729 = vadd.f32 %v392, %v673
          %v730 = vadd.f32 %v393, %v676
          %v731 = vadd.f32 %v394, %v681
          %v732 = vadd.f32 %v395, %v684
          %v733 = vadd.f32 %v396, %v689
          %v734 = vadd.f32 %v397, %v692
          %v735 = vadd.f32 %v398, %v697
          %v736 = vadd.f32 %v399, %v700
          %v737 = vadd.f32 %v400, %v705
          %v738 = vadd.f32 %v401, %v708
          %v739 = vadd.f32 %v402, %v713
          %v740 = vadd.f32 %v403, %v716
          %v741 = vadd.f32 %v404, %v721
          %v742 = vadd.f32 %v405, %v724
          %743 = vst [vmem:[#allocation2] sm:$0xff] %v727
          %744 = vst [vmem:[#allocation2 + $0x8] sm:$0xff] %v728
          %745 = vst [vmem:[#allocation2 + $0x10] sm:$0xff] %v729
          %746 = vst [vmem:[#allocation2 + $0x18] sm:$0xff] %v730
          %747 = vst [vmem:[#allocation2 + $0x20] sm:$0xff] %v731
          %748 = vst [vmem:[#allocation2 + $0x28] sm:$0xff] %v732
          %749 = vst [vmem:[#allocation2 + $0x30] sm:$0xff] %v733
          %750 = vst [vmem:[#allocation2 + $0x38] sm:$0xff] %v734
          %751 = vst [vmem:[#allocation2 + $0x40] sm:$0xff] %v735
          %752 = vst [vmem:[#allocation2 + $0x48] sm:$0xff] %v736
          %753 = vst [vmem:[#allocation2 + $0x50] sm:$0xff] %v737
          %754 = vst [vmem:[#allocation2 + $0x58] sm:$0xff] %v738
          %755 = vst [vmem:[#allocation2 + $0x60] sm:$0xff] %v739
          %756 = vst [vmem:[#allocation2 + $0x68] sm:$0xff] %v740
          %757 = vst [vmem:[#allocation2 + $0x70] sm:$0xff] %v741
          %758 = vst [vmem:[#allocation2 + $0x78] sm:$0xff] %v742
        $region64: #{tpu_custom_call.1} parent=39 // pred_fallthru
          _
        %p759 = scmp.eq.s32.totalorder %s36, 1
        // Predicated region
        $region65: #{tpu_custom_call.1} parent=39 // pred_check
          %p760 = pneg %p759
        $region66: #{tpu_custom_call.1} parent=39 // pred_check_branch
          %762 = sbr.rel (%p760) target = $region68
        $region67: #{tpu_custom_call.1} parent=39 // pred_region
          %v763 = vld [vmem:[#allocation2] sm:$0xff]
          %v764 = vld [vmem:[#allocation2 + $0x8] sm:$0xff]
          %v765 = vld [vmem:[#allocation2 + $0x10] sm:$0xff]
          %v766 = vld [vmem:[#allocation2 + $0x18] sm:$0xff]
          %v767 = vld [vmem:[#allocation2 + $0x20] sm:$0xff]
          %v768 = vld [vmem:[#allocation2 + $0x28] sm:$0xff]
          %v769 = vld [vmem:[#allocation2 + $0x30] sm:$0xff]
          %v770 = vld [vmem:[#allocation2 + $0x38] sm:$0xff]
          %v771 = vld [vmem:[#allocation2 + $0x40] sm:$0xff]
          %v772 = vld [vmem:[#allocation2 + $0x48] sm:$0xff]
          %v773 = vld [vmem:[#allocation2 + $0x50] sm:$0xff]
          %v774 = vld [vmem:[#allocation2 + $0x58] sm:$0xff]
          %v775 = vld [vmem:[#allocation2 + $0x60] sm:$0xff]
          %v776 = vld [vmem:[#allocation2 + $0x68] sm:$0xff]
          %v777 = vld [vmem:[#allocation2 + $0x70] sm:$0xff]
          %v778 = vld [vmem:[#allocation2 + $0x78] sm:$0xff]
          %v779 = vpack.c.bf16 %v764, %v763
          %v780 = vpack.c.bf16 %v766, %v765
          %v781 = vpack.c.bf16 %v768, %v767
          %v782 = vpack.c.bf16 %v770, %v769
          %v783 = vpack.c.bf16 %v772, %v771
          %v784 = vpack.c.bf16 %v774, %v773
          %v785 = vpack.c.bf16 %v776, %v775
          %v786 = vpack.c.bf16 %v778, %v777
          %v787 = vld [vmem:[#allocation10] sm:$0xf]
          %v788 = vld [vmem:[#allocation10 + $0x4] sm:$0xf]
          %v789 = vld [vmem:[#allocation10 + $0x8] sm:$0xf]
          %v790 = vld [vmem:[#allocation10 + $0xc] sm:$0xf]
          %v791 = vld [vmem:[#allocation10 + $0x10] sm:$0xf]
          %v792 = vld [vmem:[#allocation10 + $0x14] sm:$0xf]
          %v793 = vld [vmem:[#allocation10 + $0x18] sm:$0xf]
          %v794 = vld [vmem:[#allocation10 + $0x1c] sm:$0xf]
          %v795 = vld [vmem:[#allocation10 + $0x20] sm:$0xf]
          %v796 = vld [vmem:[#allocation10 + $0x24] sm:$0xf]
          %v797 = vld [vmem:[#allocation10 + $0x28] sm:$0xf]
          %v798 = vld [vmem:[#allocation10 + $0x2c] sm:$0xf]
          %v799 = vld [vmem:[#allocation10 + $0x30] sm:$0xf]
          %v800 = vld [vmem:[#allocation10 + $0x34] sm:$0xf]
          %v801 = vld [vmem:[#allocation10 + $0x38] sm:$0xf]
          %v802 = vld [vmem:[#allocation10 + $0x3c] sm:$0xf]
          %v803 = vld [vmem:[%s4] sm:$0x1]
          %v805 = vlaneseq
          %v806 = vshrl.u32 %v805, 7
          %v807 = vsub.s32 0, %v806
          %v808 = vrot.slane %v803, %v807
          %v826 = vunpack.c.l.b16 %v787
          %v827 = vunpack.c.l.b16 %v788
          %v828 = vunpack.c.l.b16 %v789
          %v829 = vunpack.c.l.b16 %v790
          %v830 = vunpack.c.l.b16 %v791
          %v831 = vunpack.c.l.b16 %v792
          %v832 = vunpack.c.l.b16 %v793
          %v833 = vunpack.c.l.b16 %v794
          %v834 = vunpack.c.l.b16 %v795
          %v835 = vunpack.c.l.b16 %v796
          %v836 = vunpack.c.l.b16 %v797
          %v837 = vunpack.c.l.b16 %v798
          %v838 = vunpack.c.l.b16 %v799
          %v839 = vunpack.c.l.b16 %v800
          %v840 = vunpack.c.l.b16 %v801
          %v841 = vunpack.c.l.b16 %v802
          %v842 = vpack.c.b16 %v827, %v826
          %v843 = vpack.c.b16 %v829, %v828
          %v844 = vpack.c.b16 %v831, %v830
          %v845 = vpack.c.b16 %v833, %v832
          %v846 = vpack.c.b16 %v835, %v834
          %v847 = vpack.c.b16 %v837, %v836
          %v848 = vpack.c.b16 %v839, %v838
          %v849 = vpack.c.b16 %v841, %v840
          %858 = vmatprep.subr.bf16.mxu0 0
          %859 = vmatpush1.bf16.msra.mxu0 %v842
          %860 = vmatprep.subr.bf16.mxu0 0
          %861 = vmatpush1.bf16.msra.mxu0 %v843
          %862 = vmatprep.subr.bf16.mxu0 0
          %863 = vmatpush1.bf16.msra.mxu0 %v844
          %864 = vmatprep.subr.bf16.mxu0 0
          %865 = vmatpush1.bf16.msra.mxu0 %v845
          %866 = vmatprep.subr.bf16.mxu0 0
          %867 = vmatpush1.bf16.msra.mxu0 %v846
          %868 = vmatprep.subr.bf16.mxu0 0
          %869 = vmatpush1.bf16.msra.mxu0 %v847
          %870 = vmatprep.subr.bf16.mxu0 0
          %871 = vmatpush1.bf16.msra.mxu0 %v848
          %872 = vmatprep.subr.bf16.mxu0 0
          %873 = vmatpush1.bf16.msra.mxu0 %v849
          %874 = vmatprep.subr.bf16.mxu0 0
          %875 = vmatpush1.bf16.msra.mxu0 0
          %876 = vmatprep.subr.bf16.mxu0 0
          %877 = vmatpush1.bf16.msra.mxu0 0
          %878 = vmatprep.subr.bf16.mxu0 0
          %879 = vmatpush1.bf16.msra.mxu0 0
          %880 = vmatprep.subr.bf16.mxu0 0
          %881 = vmatpush1.bf16.msra.mxu0 0
          %882 = vmatprep.subr.bf16.mxu0 0
          %883 = vmatpush1.bf16.msra.mxu0 0
          %884 = vmatprep.subr.bf16.mxu0 0
          %885 = vmatpush1.bf16.msra.mxu0 0
          %886 = vmatprep.subr.bf16.mxu0 0
          %887 = vmatpush1.bf16.msra.mxu0 0
          %888 = vmatprep.subr.bf16.mxu0 0
          %889 = vmatpush1.bf16.msra.mxu0 0
          %890 = vmatprep.mubr.bf16.mxu0 0
          %891 = vmatmul.mubr.bf16.gmra.mrb[0].mxu0 %v779
          %v892 = vpop.f32.mrb[0].mxu0
          %v893 = vadd.f32 %v808, %v892
          %v894 = vpop.f32.mrb[0].mxu0
          %v895 = vpop.f32.mrb[0].mxu0
          %v896 = vadd.f32 %v808, %v895
          %v897 = vpop.f32.mrb[0].mxu0
          %898 = vmatprep.mubr.bf16.mxu0 0
          %899 = vmatmul.mubr.bf16.gmra.mrb[0].mxu0 %v780
          %v900 = vpop.f32.mrb[0].mxu0
          %v901 = vadd.f32 %v808, %v900
          %v902 = vpop.f32.mrb[0].mxu0
          %v903 = vpop.f32.mrb[0].mxu0
          %v904 = vadd.f32 %v808, %v903
          %v905 = vpop.f32.mrb[0].mxu0
          %906 = vmatprep.mubr.bf16.mxu0 0
          %907 = vmatmul.mubr.bf16.gmra.mrb[0].mxu0 %v781
          %v908 = vpop.f32.mrb[0].mxu0
          %v909 = vadd.f32 %v808, %v908
          %v910 = vpop.f32.mrb[0].mxu0
          %v911 = vpop.f32.mrb[0].mxu0
          %v912 = vadd.f32 %v808, %v911
          %v913 = vpop.f32.mrb[0].mxu0
          %914 = vmatprep.mubr.bf16.mxu0 0
          %915 = vmatmul.mubr.bf16.gmra.mrb[0].mxu0 %v782
          %v916 = vpop.f32.mrb[0].mxu0
          %v917 = vadd.f32 %v808, %v916
          %v918 = vpop.f32.mrb[0].mxu0
          %v919 = vpop.f32.mrb[0].mxu0
          %v920 = vadd.f32 %v808, %v919
          %v921 = vpop.f32.mrb[0].mxu0
          %922 = vmatprep.mubr.bf16.mxu0 0
          %923 = vmatmul.mubr.bf16.gmra.mrb[0].mxu0 %v783
          %v924 = vpop.f32.mrb[0].mxu0
          %v925 = vadd.f32 %v808, %v924
          %v926 = vpop.f32.mrb[0].mxu0
          %v927 = vpop.f32.mrb[0].mxu0
          %v928 = vadd.f32 %v808, %v927
          %v929 = vpop.f32.mrb[0].mxu0
          %930 = vmatprep.mubr.bf16.mxu0 0
          %931 = vmatmul.mubr.bf16.gmra.mrb[0].mxu0 %v784
          %v932 = vpop.f32.mrb[0].mxu0
          %v933 = vadd.f32 %v808, %v932
          %v934 = vpop.f32.mrb[0].mxu0
          %v935 = vpop.f32.mrb[0].mxu0
          %v936 = vadd.f32 %v808, %v935
          %v937 = vpop.f32.mrb[0].mxu0
          %938 = vmatprep.mubr.bf16.mxu0 0
          %939 = vmatmul.mubr.bf16.gmra.mrb[0].mxu0 %v785
          %v940 = vpop.f32.mrb[0].mxu0
          %v941 = vadd.f32 %v808, %v940
          %v942 = vpop.f32.mrb[0].mxu0
          %v943 = vpop.f32.mrb[0].mxu0
          %v944 = vadd.f32 %v808, %v943
          %v945 = vpop.f32.mrb[0].mxu0
          %946 = vmatprep.mubr.bf16.mxu0 0
          %947 = vmatmul.mubr.bf16.gmra.mrb[0].mxu0 %v786
          %v948 = vpop.f32.mrb[0].mxu0
          %v949 = vadd.f32 %v808, %v948
          %v950 = vpop.f32.mrb[0].mxu0
          %v951 = vpop.f32.mrb[0].mxu0
          %v952 = vadd.f32 %v808, %v951
          %v953 = vpop.f32.mrb[0].mxu0
          %954 = vdwg.mxu0
          %v955 = vmax.f32 %v893, 0.0
          %v956 = vmax.f32 %v896, 0.0
          %v957 = vmax.f32 %v901, 0.0
          %v958 = vmax.f32 %v904, 0.0
          %v959 = vmax.f32 %v909, 0.0
          %v960 = vmax.f32 %v912, 0.0
          %v961 = vmax.f32 %v917, 0.0
          %v962 = vmax.f32 %v920, 0.0
          %v963 = vmax.f32 %v925, 0.0
          %v964 = vmax.f32 %v928, 0.0
          %v965 = vmax.f32 %v933, 0.0
          %v966 = vmax.f32 %v936, 0.0
          %v967 = vmax.f32 %v941, 0.0
          %v968 = vmax.f32 %v944, 0.0
          %v969 = vmax.f32 %v949, 0.0
          %v970 = vmax.f32 %v952, 0.0
          %v971 = vpack.c.bf16 %v956, %v955
          %v972 = vpack.c.bf16 %v958, %v957
          %v973 = vpack.c.bf16 %v960, %v959
          %v974 = vpack.c.bf16 %v962, %v961
          %v975 = vpack.c.bf16 %v964, %v963
          %v976 = vpack.c.bf16 %v966, %v965
          %v977 = vpack.c.bf16 %v968, %v967
          %v978 = vpack.c.bf16 %v970, %v969
          %v979 = vld [vmem:[#allocation11] sm:$0xf]
          %v980 = vld [vmem:[#allocation11 + $0x4] sm:$0xf]
          %v981 = vld [vmem:[#allocation11 + $0x8] sm:$0xf]
          %v982 = vld [vmem:[#allocation11 + $0xc] sm:$0xf]
          %v983 = vld [vmem:[#allocation11 + $0x10] sm:$0xf]
          %v984 = vld [vmem:[#allocation11 + $0x14] sm:$0xf]
          %v985 = vld [vmem:[#allocation11 + $0x18] sm:$0xf]
          %v986 = vld [vmem:[#allocation11 + $0x1c] sm:$0xf]
          %v987 = vld [vmem:[#allocation11 + $0x20] sm:$0xf]
          %v988 = vld [vmem:[#allocation11 + $0x24] sm:$0xf]
          %v989 = vld [vmem:[#allocation11 + $0x28] sm:$0xf]
          %v990 = vld [vmem:[#allocation11 + $0x2c] sm:$0xf]
          %v991 = vld [vmem:[#allocation11 + $0x30] sm:$0xf]
          %v992 = vld [vmem:[#allocation11 + $0x34] sm:$0xf]
          %v993 = vld [vmem:[#allocation11 + $0x38] sm:$0xf]
          %v994 = vld [vmem:[#allocation11 + $0x3c] sm:$0xf]
          %v1011 = vunpack.c.l.b16 %v979
          %v1012 = vunpack.c.l.b16 %v980
          %v1013 = vunpack.c.l.b16 %v981
          %v1014 = vunpack.c.l.b16 %v982
          %v1015 = vunpack.c.l.b16 %v983
          %v1016 = vunpack.c.l.b16 %v984
          %v1017 = vunpack.c.l.b16 %v985
          %v1018 = vunpack.c.l.b16 %v986
          %v1019 = vunpack.c.l.b16 %v987
          %v1020 = vunpack.c.l.b16 %v988
          %v1021 = vunpack.c.l.b16 %v989
          %v1022 = vunpack.c.l.b16 %v990
          %v1023 = vunpack.c.l.b16 %v991
          %v1024 = vunpack.c.l.b16 %v992
          %v1025 = vunpack.c.l.b16 %v993
          %v1026 = vunpack.c.l.b16 %v994
          %v1027 = vpack.c.b16 %v1012, %v1011
          %v1028 = vpack.c.b16 %v1014, %v1013
          %v1029 = vpack.c.b16 %v1016, %v1015
          %v1030 = vpack.c.b16 %v1018, %v1017
          %v1031 = vpack.c.b16 %v1020, %v1019
          %v1032 = vpack.c.b16 %v1022, %v1021
          %v1033 = vpack.c.b16 %v1024, %v1023
          %v1034 = vpack.c.b16 %v1026, %v1025
          %1043 = vmatprep.subr.bf16.mxu0 0
          %1044 = vmatpush1.bf16.msra.mxu0 %v1027
          %1045 = vmatprep.subr.bf16.mxu0 0
          %1046 = vmatpush1.bf16.msra.mxu0 %v1028
          %1047 = vmatprep.subr.bf16.mxu0 0
          %1048 = vmatpush1.bf16.msra.mxu0 %v1029
          %1049 = vmatprep.subr.bf16.mxu0 0
          %1050 = vmatpush1.bf16.msra.mxu0 %v1030
          %1051 = vmatprep.subr.bf16.mxu0 0
          %1052 = vmatpush1.bf16.msra.mxu0 %v1031
          %1053 = vmatprep.subr.bf16.mxu0 0
          %1054 = vmatpush1.bf16.msra.mxu0 %v1032
          %1055 = vmatprep.subr.bf16.mxu0 0
          %1056 = vmatpush1.bf16.msra.mxu0 %v1033
          %1057 = vmatprep.subr.bf16.mxu0 0
          %1058 = vmatpush1.bf16.msra.mxu0 %v1034
          %1059 = vmatprep.subr.bf16.mxu0 0
          %1060 = vmatpush1.bf16.msra.mxu0 0
          %1061 = vmatprep.subr.bf16.mxu0 0
          %1062 = vmatpush1.bf16.msra.mxu0 0
          %1063 = vmatprep.subr.bf16.mxu0 0
          %1064 = vmatpush1.bf16.msra.mxu0 0
          %1065 = vmatprep.subr.bf16.mxu0 0
          %1066 = vmatpush1.bf16.msra.mxu0 0
          %1067 = vmatprep.subr.bf16.mxu0 0
          %1068 = vmatpush1.bf16.msra.mxu0 0
          %1069 = vmatprep.subr.bf16.mxu0 0
          %1070 = vmatpush1.bf16.msra.mxu0 0
          %1071 = vmatprep.subr.bf16.mxu0 0
          %1072 = vmatpush1.bf16.msra.mxu0 0
          %1073 = vmatprep.subr.bf16.mxu0 0
          %1074 = vmatpush1.bf16.msra.mxu0 0
          %1075 = vmatprep.mubr.bf16.mxu0 0
          %1076 = vmatmul.mubr.bf16.gmra.mrb[0].mxu0 %v971
          %v1077 = vpop.f32.mrb[0].mxu0
          %v1078 = vadd.f32 0.0, %v1077
          %v1079 = vpop.f32.mrb[0].mxu0
          %v1080 = vpop.f32.mrb[0].mxu0
          %v1081 = vadd.f32 0.0, %v1080
          %v1082 = vpop.f32.mrb[0].mxu0
          %1083 = vmatprep.mubr.bf16.mxu0 0
          %1084 = vmatmul.mubr.bf16.gmra.mrb[0].mxu0 %v972
          %v1085 = vpop.f32.mrb[0].mxu0
          %v1086 = vadd.f32 0.0, %v1085
          %v1087 = vpop.f32.mrb[0].mxu0
          %v1088 = vpop.f32.mrb[0].mxu0
          %v1089 = vadd.f32 0.0, %v1088
          %v1090 = vpop.f32.mrb[0].mxu0
          %1091 = vmatprep.mubr.bf16.mxu0 0
          %1092 = vmatmul.mubr.bf16.gmra.mrb[0].mxu0 %v973
          %v1093 = vpop.f32.mrb[0].mxu0
          %v1094 = vadd.f32 0.0, %v1093
          %v1095 = vpop.f32.mrb[0].mxu0
          %v1096 = vpop.f32.mrb[0].mxu0
          %v1097 = vadd.f32 0.0, %v1096
          %v1098 = vpop.f32.mrb[0].mxu0
          %1099 = vmatprep.mubr.bf16.mxu0 0
          %1100 = vmatmul.mubr.bf16.gmra.mrb[0].mxu0 %v974
          %v1101 = vpop.f32.mrb[0].mxu0
          %v1102 = vadd.f32 0.0, %v1101
          %v1103 = vpop.f32.mrb[0].mxu0
          %v1104 = vpop.f32.mrb[0].mxu0
          %v1105 = vadd.f32 0.0, %v1104
          %v1106 = vpop.f32.mrb[0].mxu0
          %1107 = vmatprep.mubr.bf16.mxu0 0
          %1108 = vmatmul.mubr.bf16.gmra.mrb[0].mxu0 %v975
          %v1109 = vpop.f32.mrb[0].mxu0
          %v1110 = vadd.f32 0.0, %v1109
          %v1111 = vpop.f32.mrb[0].mxu0
          %v1112 = vpop.f32.mrb[0].mxu0
          %v1113 = vadd.f32 0.0, %v1112
          %v1114 = vpop.f32.mrb[0].mxu0
          %1115 = vmatprep.mubr.bf16.mxu0 0
          %1116 = vmatmul.mubr.bf16.gmra.mrb[0].mxu0 %v976
          %v1117 = vpop.f32.mrb[0].mxu0
          %v1118 = vadd.f32 0.0, %v1117
          %v1119 = vpop.f32.mrb[0].mxu0
          %v1120 = vpop.f32.mrb[0].mxu0
          %v1121 = vadd.f32 0.0, %v1120
          %v1122 = vpop.f32.mrb[0].mxu0
          %1123 = vmatprep.mubr.bf16.mxu0 0
          %1124 = vmatmul.mubr.bf16.gmra.mrb[0].mxu0 %v977
          %v1125 = vpop.f32.mrb[0].mxu0
          %v1126 = vadd.f32 0.0, %v1125
          %v1127 = vpop.f32.mrb[0].mxu0
          %v1128 = vpop.f32.mrb[0].mxu0
          %v1129 = vadd.f32 0.0, %v1128
          %v1130 = vpop.f32.mrb[0].mxu0
          %1131 = vmatprep.mubr.bf16.mxu0 0
          %1132 = vmatmul.mubr.bf16.gmra.mrb[0].mxu0 %v978
          %v1133 = vpop.f32.mrb[0].mxu0
          %v1134 = vadd.f32 0.0, %v1133
          %v1135 = vpop.f32.mrb[0].mxu0
          %v1136 = vpop.f32.mrb[0].mxu0
          %v1137 = vadd.f32 0.0, %v1136
          %v1138 = vpop.f32.mrb[0].mxu0
          %1139 = vdwg.mxu0
          %v1140 = vpack.c.bf16 %v1081, %v1078
          %v1141 = vpack.c.bf16 %v1089, %v1086
          %v1142 = vpack.c.bf16 %v1097, %v1094
          %v1143 = vpack.c.bf16 %v1105, %v1102
          %v1144 = vpack.c.bf16 %v1113, %v1110
          %v1145 = vpack.c.bf16 %v1121, %v1118
          %v1146 = vpack.c.bf16 %v1129, %v1126
          %v1147 = vpack.c.bf16 %v1137, %v1134
          %v1156 = vunpack.c.l.b16 %v1140
          %v1157 = vunpack.c.h.b16 %v1140
          %v1158 = vunpack.c.l.b16 %v1141
          %v1159 = vunpack.c.h.b16 %v1141
          %v1160 = vunpack.c.l.b16 %v1142
          %v1161 = vunpack.c.h.b16 %v1142
          %v1162 = vunpack.c.l.b16 %v1143
          %v1163 = vunpack.c.h.b16 %v1143
          %v1164 = vunpack.c.l.b16 %v1144
          %v1165 = vunpack.c.h.b16 %v1144
          %v1166 = vunpack.c.l.b16 %v1145
          %v1167 = vunpack.c.h.b16 %v1145
          %v1168 = vunpack.c.l.b16 %v1146
          %v1169 = vunpack.c.h.b16 %v1146
          %v1170 = vunpack.c.l.b16 %v1147
          %v1171 = vunpack.c.h.b16 %v1147
          %v1172 = vpack.c.b16 %v1156, %v1156
          %v1173 = vpack.c.b16 %v1157, %v1157
          %v1174 = vpack.c.b16 %v1158, %v1158
          %v1175 = vpack.c.b16 %v1159, %v1159
          %v1176 = vpack.c.b16 %v1160, %v1160
          %v1177 = vpack.c.b16 %v1161, %v1161
          %v1178 = vpack.c.b16 %v1162, %v1162
          %v1179 = vpack.c.b16 %v1163, %v1163
          %v1180 = vpack.c.b16 %v1164, %v1164
          %v1181 = vpack.c.b16 %v1165, %v1165
          %v1182 = vpack.c.b16 %v1166, %v1166
          %v1183 = vpack.c.b16 %v1167, %v1167
          %v1184 = vpack.c.b16 %v1168, %v1168
          %v1185 = vpack.c.b16 %v1169, %v1169
          %v1186 = vpack.c.b16 %v1170, %v1170
          %v1187 = vpack.c.b16 %v1171, %v1171
          %1204 = vst [vmem:[%s351] sm:$0xf] %v1172
          %1205 = vst [vmem:[%s351 + $0x4] sm:$0xf] %v1173
          %1206 = vst [vmem:[%s351 + $0x8] sm:$0xf] %v1174
          %1207 = vst [vmem:[%s351 + $0xc] sm:$0xf] %v1175
          %1208 = vst [vmem:[%s351 + $0x10] sm:$0xf] %v1176
          %1209 = vst [vmem:[%s351 + $0x14] sm:$0xf] %v1177
          %1210 = vst [vmem:[%s351 + $0x18] sm:$0xf] %v1178
          %1211 = vst [vmem:[%s351 + $0x1c] sm:$0xf] %v1179
          %1212 = vst [vmem:[%s351 + $0x20] sm:$0xf] %v1180
          %1213 = vst [vmem:[%s351 + $0x24] sm:$0xf] %v1181
          %1214 = vst [vmem:[%s351 + $0x28] sm:$0xf] %v1182
          %1215 = vst [vmem:[%s351 + $0x2c] sm:$0xf] %v1183
          %1216 = vst [vmem:[%s351 + $0x30] sm:$0xf] %v1184
          %1217 = vst [vmem:[%s351 + $0x34] sm:$0xf] %v1185
          %1218 = vst [vmem:[%s351 + $0x38] sm:$0xf] %v1186
          %1219 = vst [vmem:[%s351 + $0x3c] sm:$0xf] %v1187
        $region68: #{tpu_custom_call.1} parent=39 // pred_fallthru
          _
        %s1220 = sand.u32 %s180, 1
        %s1221 = scalar_lea.sflag [#allocation7], %s1220
        %s1222 = sand.u32 %s180, 1
        %s1223 = smul.addr %s1222, 64
        %s1224 = scalar_lea.vmem [#allocation13], %s1223
        // Predicated region
        $region69: #{tpu_custom_call.1} parent=39 // pred_check
          %p1225 = pneg %p190
        $region70: #{tpu_custom_call.1} parent=39 // pred_check_branch
          %1227 = sbr.rel (%p1225) target = $region72
        $region71: #{tpu_custom_call.1} parent=39 // pred_region
          %s1228 = smul.u32 16, %s35
          %s1230 = ssub.s32 1024, 1024
          %1231 = vsyncadd %s1221, %s1230
          %s1232 = smul.addr %s1228, 64
          %s1233 = scalar_lea.hbm %s6, %s1232
          %s1234 = sshll.u32 %s1224, 4
          %s1235 = int_to_ptr.vmem [resolvable:$true] %s1234
          %1240 = dma.vmem_to_hbm [thread:$0]  %s1235, 1024, %s1233, %s1221, 64, 64, 4
        $region72: #{tpu_custom_call.1} parent=39 // pred_fallthru
          _
      $region40: #{tpu_custom_call.1} parent=5 // pred_fallthru
        _
      %p1241 = scmp.le.s32.totalorder 2, %s26
      // Predicated region
      $region73: #{tpu_custom_call.1} parent=5 // pred_check
        %p1242 = pneg %p1241
      $region74: #{tpu_custom_call.1} parent=5 // pred_check_branch
        %1244 = sbr.rel (%p1242) target = $region76
      $region75: #{tpu_custom_call.1} parent=5 // pred_region
        %s1245 = ssub.s32 %s26, 2
        // Predicated region
        $region77: #{tpu_custom_call.1} parent=75 // pred_check
          %p1246 = pneg %p196
        $region78: #{tpu_custom_call.1} parent=75 // pred_check_branch
          %1248 = sbr.rel (%p1246) target = $region80
        $region79: #{tpu_custom_call.1} parent=75 // pred_region
          %s1249 = sand.u32 %s181, 1
          %s1250 = scalar_lea.sflag [#allocation7], %s1249
          %s1251 = sand.u32 %s181, 1
          %s1252 = smul.addr %s1251, 64
          %s1253 = scalar_lea.vmem [#allocation13], %s1252
          %1254 = dma.done %s1250, 1024
        $region80: #{tpu_custom_call.1} parent=75 // pred_fallthru
          _
      $region76: #{tpu_custom_call.1} parent=5 // pred_fallthru
        _
    $region6: #{tpu_custom_call.1} parent=1 // loop_footer
      %s30 = sadd.s32 1, %s26
    $region7: #{tpu_custom_call.1} parent=1 // loop_footer_branch
      %25 = sbr.rel target = $region3
    $region8: #{tpu_custom_call.1} parent=1 // loop_exit
      _
    %1255 = vsyncpa [#allocation6], 1
    %s1256 = scalar_lea.sflag [#allocation6], 1
    %1257 = vsyncpa %s1256, 1
    %1258 = vsyncpa [#allocation9], 1
    %s1259 = scalar_lea.sflag [#allocation9], 1
    %1260 = vsyncpa %s1259, 1
    %1261 = vsyncpa [#allocation12], 1
    %1262 = vsyncpa [#allocation7], 1
    %s1263 = scalar_lea.sflag [#allocation7], 1
    %1264 = vsyncpa %s1263, 1

</llo_original>
